<compile_context>
chip_gen: v6e
topology: v6e:2x2x1
jax: 0.10.0
libtpu: 0.0.40
codegen_flags: <defaults>
</compile_context>

<pallas_src>
import jax
import jax.numpy as jnp
from jax.experimental import pallas as pl
from jax.experimental.pallas import tpu as pltpu

K = 3            # kernel_size
PAD = 1          # padding (same-length conv)
MAX_ROWS = 8192  # cap on R = Bt*L rows per grid step (keeps the per-step working
                 # set at a few MiB on every generation, incl. v7x's 64 MiB VMEM)


def _round_up(v, m):
    return -(-v // m) * m


def _choose_bt(B, L):
    """Pick the batch tile Bt (multiple of 8 for the sublane BlockSpec constraint)."""
    bt = max(8, min(B, max(8, MAX_ROWS // max(L, 1))))
    # Prefer >= 2 grid steps so ("parallel",) can shard across v7x's two TensorCores.
    if B > 8 and bt >= B:
        bt = -(-B // 2)
    return _round_up(bt, 8)


def _conv_relu_bn(h, m_prev, m_next, w_ref, b, s, t):
    """One Conv1d(k=3, pad=1) + ReLU + folded-BatchNorm block on flattened rows.

    h: (R, Cin) f32 with R = Bt*L.
    w_ref: (3*Cin, Cout) bf16, rows stacked as [w[tap -1]; w[tap 0]; w[tap +1]].
    b/s/t: (1, Cout) f32 conv bias / folded BN scale / shift.
    m_prev/m_next: (R, 1) f32 0/1 masks zeroing taps that fall outside each
    sequence (reproduces zero-padding and blocks cross-sample leakage in a tile).
    """
    R = h.shape[0]
    prev = pltpu.roll(h, shift=1, axis=0) * m_prev       # x[l-1]  (XLU shift)
    nxt = pltpu.roll(h, shift=R - 1, axis=0) * m_next    # x[l+1]
    lhs = jnp.concatenate([prev, h, nxt], axis=-1).astype(jnp.bfloat16)  # (R, 3*Cin)
    y = jnp.dot(lhs, w_ref[...], preferred_element_type=jnp.float32)     # one MXU dot
    y = jnp.maximum(y + b, 0.0)                          # conv bias + ReLU (f32 VPU)
    return y * s + t                                     # folded BatchNorm (eval)


def _cnn1d_kernel(x_ref, m_ref, w1_ref, w2_ref, w3_ref, pv_ref, o_ref):
    R = x_ref.shape[0]
    Bt = o_ref.shape[0]
    L = R // Bt
    C1 = w1_ref.shape[1]
    C2 = w2_ref.shape[1]
    C3 = w3_ref.shape[1]

    x = x_ref[...].astype(jnp.float32)                   # (R, Cin); bf16 in HBM
    m = m_ref[...]
    m_prev = m[:, 0:1]
    m_next = m[:, 1:2]
    pv = pv_ref[...]                                      # (11, Cmax) packed params

    h = _conv_relu_bn(x, m_prev, m_next, w1_ref,
                      pv[0:1, :C1], pv[1:2, :C1], pv[2:3, :C1])
    # Dropout: identity in eval mode.
    h = _conv_relu_bn(h, m_prev, m_next, w2_ref,
                      pv[3:4, :C2], pv[4:5, :C2], pv[5:6, :C2])
    h = _conv_relu_bn(h, m_prev, m_next, w3_ref,
                      pv[6:7, :C3], pv[7:8, :C3], pv[8:9, :C3])   # (R, 16) f32

    # AdaptiveAvgPool1d(1): per-sample mean over its L rows via a sublane-aligned
    # reshape + reduce (no dense pooling matrix).
    pooled = jnp.mean(h.reshape(Bt, L, C3), axis=1)       # (Bt, 16)

    # Linear(16, 1): FC weight stored as a row in the slab -> lane-axis reduction.
    wfc_row = pv[9:10, :C3]
    bfc = pv[10:11, 0:1]
    o_ref[...] = jnp.sum(pooled * wfc_row, axis=-1, keepdims=True) + bfc


@jax.jit
def cnn1d_forward(x, params):
    """x: (B, L, input_dim) float32 -> (B, 1) float32 (eval-mode forward)."""
    B, L, Cin = x.shape
    (w1, b1, s1, t1, w2, b2, s2, t2, w3, b3, s3, t3, wfc, bfc) = params
    C1, C2, C3 = w1.shape[2], w2.shape[2], w3.shape[2]

    Bt = _choose_bt(B, L)
    nblk = -(-B // Bt)
    B_pad = nblk * Bt
    if B_pad != B:
        x = jnp.pad(x, ((0, B_pad - B), (0, 0), (0, 0)))
    # bf16 input: halves the only B-scaled HBM read and feeds the MXU natively.
    x_flat = x.reshape(B_pad * L, Cin).astype(jnp.bfloat16)   # row = (batch, position)

    R = Bt * L
    l_idx = jnp.arange(R, dtype=jnp.int32) % L
    boundary_mask = jnp.stack([(l_idx != 0).astype(jnp.float32),
                               (l_idx != L - 1).astype(jnp.float32)],
                              axis=1)                          # (R, 2), tile-invariant

    # Per-layer weights reshaped so each conv layer is a single (R,3*Cin)@(3*Cin,Cout) dot.
    w1m = w1.reshape(K * Cin, C1).astype(jnp.bfloat16)
    w2m = w2.reshape(K * C1, C2).astype(jnp.bfloat16)
    w3m = w3.reshape(K * C2, C3).astype(jnp.bfloat16)

    # Pack the 9 per-channel vectors + FC weight/bias into one f32 slab.
    Cmax = max(C1, C2, C3)

    def _row(v):
        v = v.reshape(1, -1)
        return jnp.pad(v, ((0, 0), (0, Cmax - v.shape[1])))

    pslab = jnp.concatenate(
        [_row(b1), _row(s1), _row(t1),
         _row(b2), _row(s2), _row(t2),
         _row(b3), _row(s3), _row(t3),
         _row(wfc), _row(bfc)], axis=0)                        # (11, Cmax)

    flops = (2 * B_pad * L * K * (Cin * C1 + C1 * C2 + C2 * C3)
             + 2 * B_pad * L * C3 + 2 * B_pad * C3)
    const_bytes = (2 * (w1m.size + w2m.size + w3m.size)
                   + 4 * (pslab.size + boundary_mask.size))
    bytes_accessed = 2 * x_flat.size + nblk * const_bytes + 4 * B_pad

    out = pl.pallas_call(
        _cnn1d_kernel,
        out_shape=jax.ShapeDtypeStruct((B_pad, 1), jnp.float32),
        grid=(nblk,),
        in_specs=[
            pl.BlockSpec((R, Cin), lambda i: (i, 0)),
            pl.BlockSpec((R, 2), lambda i: (0, 0)),
            pl.BlockSpec((K * Cin, C1), lambda i: (0, 0)),
            pl.BlockSpec((K * C1, C2), lambda i: (0, 0)),
            pl.BlockSpec((K * C2, C3), lambda i: (0, 0)),
            pl.BlockSpec((11, Cmax), lambda i: (0, 0)),
        ],
        out_specs=pl.BlockSpec((Bt, 1), lambda i: (i, 0)),
        compiler_params=pltpu.CompilerParams(
            dimension_semantics=("parallel",),
            vmem_limit_bytes=32 * 1024 * 1024),
        cost_estimate=pl.CostEstimate(
            flops=int(flops), transcendentals=0,
            bytes_accessed=int(bytes_accessed)),
    )(x_flat, boundary_mask, w1m, w2m, w3m, pslab)
    return out[:B]


def init_params(key, input_dim, hidden_size):
    """Deterministic synthetic parameters matching CNN1D's shapes (eval mode)."""
    h1, h2, h3 = hidden_size, hidden_size // 2, 16
    dims = [(input_dim, h1), (h1, h2), (h2, h3)]
    eps = 1e-5
    params = []
    keys = jax.random.split(key, 16)
    ki = 0
    for (cin, cout) in dims:
        w = jax.random.normal(keys[ki], (K, cin, cout), jnp.float32) * 0.1; ki += 1
        b = jax.random.normal(keys[ki], (1, cout), jnp.float32) * 0.1;       ki += 1
        gamma = 1.0 + 0.1 * jax.random.normal(keys[ki], (1, cout), jnp.float32); ki += 1
        beta = 0.1 * jax.random.normal(keys[ki], (1, cout), jnp.float32);        ki += 1
        run_mean = jnp.zeros((1, cout), jnp.float32)     # torch BatchNorm1d init
        run_var = jnp.ones((1, cout), jnp.float32)
        scale = gamma / jnp.sqrt(run_var + eps)
        shift = beta - run_mean * scale
        params += [w, b, scale, shift]
    wfc = jax.random.normal(keys[ki], (h3, 1), jnp.float32) * 0.1; ki += 1
    bfc = jax.random.normal(keys[ki], (1, 1), jnp.float32) * 0.1
    params += [wfc, bfc]
    return tuple(params)


def reference_forward(x, params):
    """Pure-JAX reference with the same bf16-rounded dot operands / f32 accumulation."""
    (w1, b1, s1, t1, w2, b2, s2, t2, w3, b3, s3, t3, wfc, bfc) = params

    def block(h, w, b, s, t):
        hp = jnp.pad(h, ((0, 0), (PAD, PAD), (0, 0)))
        hp = hp.astype(jnp.bfloat16).astype(jnp.float32)          # dot operands in bf16
        wb = w.astype(jnp.bfloat16).astype(jnp.float32)
        acc = sum(jnp.einsum("blc,cd->bld", hp[:, k:k + h.shape[1], :], wb[k],
                             precision=jax.lax.Precision.HIGHEST)
                  for k in range(K)) + b
        return jnp.maximum(acc, 0.0) * s + t

    h = block(x, w1, b1, s1, t1)
    h = block(h, w2, b2, s2, t2)
    h = block(h, w3, b3, s3, t3)
    pooled = jnp.mean(h, axis=1)                                  # (B, 16)
    return pooled @ wfc + bfc                                     # (B, 1)


if __name__ == "__main__":
    batch, seq_len, input_dim, hidden_size = 2, 16, 8, 32

    key = jax.random.PRNGKey(0)
    kx, kp = jax.random.split(key)
    x = jax.random.normal(kx, (batch, seq_len, input_dim), jnp.float32)
    params = init_params(kp, input_dim, hidden_size)

    out = cnn1d_forward(x, params)
    out = jax.block_until_ready(out)

    ref = reference_forward(x, params)
    assert out.shape == (batch, 1), out.shape
    assert jnp.allclose(out, ref, atol=1e-3, rtol=1e-3), (out, ref)

    print("KERNEL_OK")
</pallas_src>

<mosaic_0001>
module attributes {stable_mosaic.version = 11 : i64} {
  func.func @_cnn1d_kernel(%arg0: i32, %arg1: memref<128x8xbf16, #tpu.memory_space<vmem>>, %arg2: memref<128x2xf32, #tpu.memory_space<vmem>>, %arg3: memref<24x32xbf16, #tpu.memory_space<vmem>>, %arg4: memref<96x16xbf16, #tpu.memory_space<vmem>>, %arg5: memref<48x16xbf16, #tpu.memory_space<vmem>>, %arg6: memref<11x32xf32, #tpu.memory_space<vmem>>, %arg7: memref<8x1xf32, #tpu.memory_space<vmem>>) attributes {dimension_semantics = [#tpu.dimension_semantics<parallel>], iteration_bounds = array<i64: 1>, scalar_prefetch = 0 : i64, scratch_operands = 0 : i64, tpu.core_type = #tpu.core_type<tc>, window_params = [{transform_indices = @transform_0, window_bounds = array<i64: 128, 8>}, {pipeline_mode = #tpu.pipeline_mode<synchronous>, transform_indices = @transform_1, window_bounds = array<i64: 128, 2>}, {pipeline_mode = #tpu.pipeline_mode<synchronous>, transform_indices = @transform_2, window_bounds = array<i64: 24, 32>}, {pipeline_mode = #tpu.pipeline_mode<synchronous>, transform_indices = @transform_3, window_bounds = array<i64: 96, 16>}, {pipeline_mode = #tpu.pipeline_mode<synchronous>, transform_indices = @transform_4, window_bounds = array<i64: 48, 16>}, {pipeline_mode = #tpu.pipeline_mode<synchronous>, transform_indices = @transform_5, window_bounds = array<i64: 11, 32>}, {transform_indices = @transform_6, window_bounds = array<i64: 8, 1>}]} {
    %c0 = arith.constant 0 : index
    %c0_0 = arith.constant 0 : index
    %0 = vector.load %arg1[%c0, %c0_0] : memref<128x8xbf16, #tpu.memory_space<vmem>>, vector<128x8xbf16>
    %1 = arith.extf %0 : vector<128x8xbf16> to vector<128x8xf32>
    %c0_1 = arith.constant 0 : index
    %c0_2 = arith.constant 0 : index
    %2 = vector.load %arg2[%c0_1, %c0_2] : memref<128x2xf32, #tpu.memory_space<vmem>>, vector<128x2xf32>
    %3 = vector.extract_strided_slice %2 {offsets = [0, 0], sizes = [128, 1], strides = [1, 1]} : vector<128x2xf32> to vector<128x1xf32>
    %4 = vector.extract_strided_slice %2 {offsets = [0, 1], sizes = [128, 1], strides = [1, 1]} : vector<128x2xf32> to vector<128x1xf32>
    %c0_3 = arith.constant 0 : index
    %c0_4 = arith.constant 0 : index
    %5 = vector.load %arg6[%c0_3, %c0_4] : memref<11x32xf32, #tpu.memory_space<vmem>>, vector<11x32xf32>
    %6 = vector.extract_strided_slice %5 {offsets = [0, 0], sizes = [1, 32], strides = [1, 1]} : vector<11x32xf32> to vector<1x32xf32>
    %7 = vector.extract_strided_slice %5 {offsets = [1, 0], sizes = [1, 32], strides = [1, 1]} : vector<11x32xf32> to vector<1x32xf32>
    %8 = vector.extract_strided_slice %5 {offsets = [2, 0], sizes = [1, 32], strides = [1, 1]} : vector<11x32xf32> to vector<1x32xf32>
    %c1_i32 = arith.constant 1 : i32
    %9 = tpu.dynamic_rotate %1 by %c1_i32 dim 0 : vector<128x8xf32>, i32 -> vector<128x8xf32>
    %10 = vector.broadcast %3 : vector<128x1xf32> to vector<128x8xf32>
    %11 = arith.mulf %9, %10 : vector<128x8xf32>
    %c127_i32 = arith.constant 127 : i32
    %12 = tpu.dynamic_rotate %1 by %c127_i32 dim 0 : vector<128x8xf32>, i32 -> vector<128x8xf32>
    %13 = vector.broadcast %4 : vector<128x1xf32> to vector<128x8xf32>
    %14 = arith.mulf %12, %13 : vector<128x8xf32>
    %15 = tpu.concatenate %11, %1, %14 in 1 : vector<128x8xf32>, vector<128x8xf32>, vector<128x8xf32> -> vector<128x24xf32>
    %16 = arith.truncf %15 : vector<128x24xf32> to vector<128x24xbf16>
    %c0_5 = arith.constant 0 : index
    %c0_6 = arith.constant 0 : index
    %17 = vector.load %arg3[%c0_5, %c0_6] : memref<24x32xbf16, #tpu.memory_space<vmem>>, vector<24x32xbf16>
    %cst = arith.constant dense<0.000000e+00> : vector<128x32xf32>
    %18 = tpu.matmul %16, %17, %cst {dimension_numbers = #tpu.dot_dimension_numbers<[1], [0], [0], [1], [0, 0, 1, 1], [], []>} : vector<128x24xbf16>, vector<24x32xbf16>, vector<128x32xf32> -> vector<128x32xf32>
    %19 = vector.broadcast %6 : vector<1x32xf32> to vector<128x32xf32>
    %20 = arith.addf %18, %19 : vector<128x32xf32>
    %cst_7 = arith.constant 0.000000e+00 : f32
    %21 = vector.broadcast %cst_7 : f32 to vector<128x32xf32>
    %22 = arith.maximumf %20, %21 : vector<128x32xf32>
    %23 = vector.broadcast %7 : vector<1x32xf32> to vector<128x32xf32>
    %24 = arith.mulf %22, %23 : vector<128x32xf32>
    %25 = vector.broadcast %8 : vector<1x32xf32> to vector<128x32xf32>
    %26 = arith.addf %24, %25 : vector<128x32xf32>
    %27 = vector.extract_strided_slice %5 {offsets = [3, 0], sizes = [1, 16], strides = [1, 1]} : vector<11x32xf32> to vector<1x16xf32>
    %28 = vector.extract_strided_slice %5 {offsets = [4, 0], sizes = [1, 16], strides = [1, 1]} : vector<11x32xf32> to vector<1x16xf32>
    %29 = vector.extract_strided_slice %5 {offsets = [5, 0], sizes = [1, 16], strides = [1, 1]} : vector<11x32xf32> to vector<1x16xf32>
    %c1_i32_8 = arith.constant 1 : i32
    %30 = tpu.dynamic_rotate %26 by %c1_i32_8 dim 0 : vector<128x32xf32>, i32 -> vector<128x32xf32>
    %31 = vector.broadcast %3 : vector<128x1xf32> to vector<128x32xf32>
    %32 = arith.mulf %30, %31 : vector<128x32xf32>
    %c127_i32_9 = arith.constant 127 : i32
    %33 = tpu.dynamic_rotate %26 by %c127_i32_9 dim 0 : vector<128x32xf32>, i32 -> vector<128x32xf32>
    %34 = vector.broadcast %4 : vector<128x1xf32> to vector<128x32xf32>
    %35 = arith.mulf %33, %34 : vector<128x32xf32>
    %36 = tpu.concatenate %32, %26, %35 in 1 : vector<128x32xf32>, vector<128x32xf32>, vector<128x32xf32> -> vector<128x96xf32>
    %37 = arith.truncf %36 : vector<128x96xf32> to vector<128x96xbf16>
    %c0_10 = arith.constant 0 : index
    %c0_11 = arith.constant 0 : index
    %38 = vector.load %arg4[%c0_10, %c0_11] : memref<96x16xbf16, #tpu.memory_space<vmem>>, vector<96x16xbf16>
    %cst_12 = arith.constant dense<0.000000e+00> : vector<128x16xf32>
    %39 = tpu.matmul %37, %38, %cst_12 {dimension_numbers = #tpu.dot_dimension_numbers<[1], [0], [0], [1], [0, 0, 1, 1], [], []>} : vector<128x96xbf16>, vector<96x16xbf16>, vector<128x16xf32> -> vector<128x16xf32>
    %40 = vector.broadcast %27 : vector<1x16xf32> to vector<128x16xf32>
    %41 = arith.addf %39, %40 : vector<128x16xf32>
    %cst_13 = arith.constant 0.000000e+00 : f32
    %42 = vector.broadcast %cst_13 : f32 to vector<128x16xf32>
    %43 = arith.maximumf %41, %42 : vector<128x16xf32>
    %44 = vector.broadcast %28 : vector<1x16xf32> to vector<128x16xf32>
    %45 = arith.mulf %43, %44 : vector<128x16xf32>
    %46 = vector.broadcast %29 : vector<1x16xf32> to vector<128x16xf32>
    %47 = arith.addf %45, %46 : vector<128x16xf32>
    %48 = vector.extract_strided_slice %5 {offsets = [6, 0], sizes = [1, 16], strides = [1, 1]} : vector<11x32xf32> to vector<1x16xf32>
    %49 = vector.extract_strided_slice %5 {offsets = [7, 0], sizes = [1, 16], strides = [1, 1]} : vector<11x32xf32> to vector<1x16xf32>
    %50 = vector.extract_strided_slice %5 {offsets = [8, 0], sizes = [1, 16], strides = [1, 1]} : vector<11x32xf32> to vector<1x16xf32>
    %c1_i32_14 = arith.constant 1 : i32
    %51 = tpu.dynamic_rotate %47 by %c1_i32_14 dim 0 : vector<128x16xf32>, i32 -> vector<128x16xf32>
    %52 = vector.broadcast %3 : vector<128x1xf32> to vector<128x16xf32>
    %53 = arith.mulf %51, %52 : vector<128x16xf32>
    %c127_i32_15 = arith.constant 127 : i32
    %54 = tpu.dynamic_rotate %47 by %c127_i32_15 dim 0 : vector<128x16xf32>, i32 -> vector<128x16xf32>
    %55 = vector.broadcast %4 : vector<128x1xf32> to vector<128x16xf32>
    %56 = arith.mulf %54, %55 : vector<128x16xf32>
    %57 = tpu.concatenate %53, %47, %56 in 1 : vector<128x16xf32>, vector<128x16xf32>, vector<128x16xf32> -> vector<128x48xf32>
    %58 = arith.truncf %57 : vector<128x48xf32> to vector<128x48xbf16>
    %c0_16 = arith.constant 0 : index
    %c0_17 = arith.constant 0 : index
    %59 = vector.load %arg5[%c0_16, %c0_17] : memref<48x16xbf16, #tpu.memory_space<vmem>>, vector<48x16xbf16>
    %cst_18 = arith.constant dense<0.000000e+00> : vector<128x16xf32>
    %60 = tpu.matmul %58, %59, %cst_18 {dimension_numbers = #tpu.dot_dimension_numbers<[1], [0], [0], [1], [0, 0, 1, 1], [], []>} : vector<128x48xbf16>, vector<48x16xbf16>, vector<128x16xf32> -> vector<128x16xf32>
    %61 = vector.broadcast %48 : vector<1x16xf32> to vector<128x16xf32>
    %62 = arith.addf %60, %61 : vector<128x16xf32>
    %cst_19 = arith.constant 0.000000e+00 : f32
    %63 = vector.broadcast %cst_19 : f32 to vector<128x16xf32>
    %64 = arith.maximumf %62, %63 : vector<128x16xf32>
    %65 = vector.broadcast %49 : vector<1x16xf32> to vector<128x16xf32>
    %66 = arith.mulf %64, %65 : vector<128x16xf32>
    %67 = vector.broadcast %50 : vector<1x16xf32> to vector<128x16xf32>
    %68 = arith.addf %66, %67 : vector<128x16xf32>
    %69 = vector.shape_cast %68 : vector<128x16xf32> to vector<8x16x16xf32>
    %cst_20 = arith.constant dense<0.000000e+00> : vector<8x16xf32>
    %70 = vector.multi_reduction <add>, %69, %cst_20 [1] : vector<8x16x16xf32> to vector<8x16xf32>
    %cst_21 = arith.constant 1.600000e+01 : f32
    %71 = vector.broadcast %cst_21 : f32 to vector<8x16xf32>
    %72 = arith.divf %70, %71 : vector<8x16xf32>
    %73 = vector.extract_strided_slice %5 {offsets = [9, 0], sizes = [1, 16], strides = [1, 1]} : vector<11x32xf32> to vector<1x16xf32>
    %74 = vector.extract_strided_slice %5 {offsets = [10, 0], sizes = [1, 1], strides = [1, 1]} : vector<11x32xf32> to vector<1x1xf32>
    %75 = vector.broadcast %73 : vector<1x16xf32> to vector<8x16xf32>
    %76 = arith.mulf %72, %75 : vector<8x16xf32>
    %cst_22 = arith.constant dense<0.000000e+00> : vector<8xf32>
    %77 = vector.multi_reduction <add>, %76, %cst_22 [1] : vector<8x16xf32> to vector<8xf32>
    %78 = vector.shape_cast %77 : vector<8xf32> to vector<8x1xf32>
    %79 = vector.broadcast %74 : vector<1x1xf32> to vector<8x1xf32>
    %80 = arith.addf %78, %79 : vector<8x1xf32>
    %c0_23 = arith.constant 0 : index
    %c0_24 = arith.constant 0 : index
    %81 = vector.load %arg7[%c0_23, %c0_24] : memref<8x1xf32, #tpu.memory_space<vmem>>, vector<8x1xf32>
    tpu.vector_store %arg7[%c0_23, %c0_24], %80 {strides = array<i32>} : memref<8x1xf32, #tpu.memory_space<vmem>>, vector<8x1xf32>,
    return
  }
  func.func @transform_0(%arg0: i32) -> (i32, i32) {
    %c0_i32 = arith.constant 0 : i32
    %c0_i32_0 = arith.constant 0 : i32
    return %arg0, %c0_i32 : i32, i32
  }
  func.func @transform_1(%arg0: i32) -> (i32, i32) {
    %c0_i32 = arith.constant 0 : i32
    %c0_i32_0 = arith.constant 0 : i32
    %c0_i32_1 = arith.constant 0 : i32
    return %c0_i32, %c0_i32_0 : i32, i32
  }
  func.func @transform_2(%arg0: i32) -> (i32, i32) {
    %c0_i32 = arith.constant 0 : i32
    %c0_i32_0 = arith.constant 0 : i32
    %c0_i32_1 = arith.constant 0 : i32
    return %c0_i32, %c0_i32_0 : i32, i32
  }
  func.func @transform_3(%arg0: i32) -> (i32, i32) {
    %c0_i32 = arith.constant 0 : i32
    %c0_i32_0 = arith.constant 0 : i32
    %c0_i32_1 = arith.constant 0 : i32
    return %c0_i32, %c0_i32_0 : i32, i32
  }
  func.func @transform_4(%arg0: i32) -> (i32, i32) {
    %c0_i32 = arith.constant 0 : i32
    %c0_i32_0 = arith.constant 0 : i32
    %c0_i32_1 = arith.constant 0 : i32
    return %c0_i32, %c0_i32_0 : i32, i32
  }
  func.func @transform_5(%arg0: i32) -> (i32, i32) {
    %c0_i32 = arith.constant 0 : i32
    %c0_i32_0 = arith.constant 0 : i32
    %c0_i32_1 = arith.constant 0 : i32
    return %c0_i32, %c0_i32_0 : i32, i32
  }
  func.func @transform_6(%arg0: i32) -> (i32, i32) {
    %c0_i32 = arith.constant 0 : i32
    %c0_i32_0 = arith.constant 0 : i32
    return %arg0, %c0_i32 : i32, i32
  }
}

</mosaic_0001>

<llo_original>
// kernel: cnn1d_forward.1
$region0: #{cnn1d_forward.1}
  #allocation0 [shape = 'u32[]', space=smem, size = 0x4, offset = 0x4, fixed_abs, tag = 'smem constant byte address 0x4 - core index']
  #allocation1 [shape = 'u32[144,128]{1,0:T(1,128)}', space=vmem, size = 0x12000, scoped, tag = 'internal scratch']
  %s0 = inlined_call_operand.vmem [shape: bf16[128,8], index: 0, kind: input, shape index: {}]
  %s1 = inlined_call_operand.vmem [shape: f32[128,2], index: 1, kind: input, shape index: {}]
  %s2 = inlined_call_operand.vmem [shape: bf16[24,32], index: 2, kind: input, shape index: {}]
  %s3 = inlined_call_operand.vmem [shape: bf16[96,16], index: 3, kind: input, shape index: {}]
  %s4 = inlined_call_operand.vmem [shape: bf16[48,16], index: 4, kind: input, shape index: {}]
  %s5 = inlined_call_operand.vmem [shape: f32[11,32], index: 5, kind: input, shape index: {}]
  %s6 = inlined_call_operand.vmem [shape: f32[8,1], index: 6, kind: output, shape index: {}]
  %s7 = sld [smem:[#allocation0]]
  $region34: #{cnn1d_forward.1} parent=0
    _
  %s9 = ssub.s32 1, %s7
  %s10 = scalar_select 0, %s9, %s7
  // Predicated region
  $region2: #{cnn1d_forward.1} parent=0 // pred_check
    _
  $region3: #{cnn1d_forward.1} parent=0 // pred_check_branch
    %12 = sbr.rel (0) target = $region5
  $region4: #{cnn1d_forward.1} parent=0 // pred_region
    _
  $region5: #{cnn1d_forward.1} parent=0 // pred_fallthru
    _
  // Predicated region
  $region6: #{cnn1d_forward.1} parent=0 // pred_check
    _
  $region7: #{cnn1d_forward.1} parent=0 // pred_check_branch
    %14 = sbr.rel (0) target = $region9
  $region8: #{cnn1d_forward.1} parent=0 // pred_region
    _
  $region9: #{cnn1d_forward.1} parent=0 // pred_fallthru
    _
  // Predicated region
  $region10: #{cnn1d_forward.1} parent=0 // pred_check
    _
  $region11: #{cnn1d_forward.1} parent=0 // pred_check_branch
    %16 = sbr.rel (0) target = $region13
  $region12: #{cnn1d_forward.1} parent=0 // pred_region
    _
  $region13: #{cnn1d_forward.1} parent=0 // pred_fallthru
    _
  // Predicated region
  $region14: #{cnn1d_forward.1} parent=0 // pred_check
    _
  $region15: #{cnn1d_forward.1} parent=0 // pred_check_branch
    %18 = sbr.rel (0) target = $region17
  $region16: #{cnn1d_forward.1} parent=0 // pred_region
    _
  $region17: #{cnn1d_forward.1} parent=0 // pred_fallthru
    _
  // Predicated region
  $region18: #{cnn1d_forward.1} parent=0 // pred_check
    _
  $region19: #{cnn1d_forward.1} parent=0 // pred_check_branch
    %20 = sbr.rel (0) target = $region21
  $region20: #{cnn1d_forward.1} parent=0 // pred_region
    _
  $region21: #{cnn1d_forward.1} parent=0 // pred_fallthru
    _
  // Predicated region
  $region22: #{cnn1d_forward.1} parent=0 // pred_check
    _
  $region23: #{cnn1d_forward.1} parent=0 // pred_check_branch
    %22 = sbr.rel (0) target = $region25
  $region24: #{cnn1d_forward.1} parent=0 // pred_region
    _
  $region25: #{cnn1d_forward.1} parent=0 // pred_fallthru
    _
  %v24 = vld [vmem:[%s0] sm:$0xf]
  %v25 = vld [vmem:[%s0 + $0x4] sm:$0xf]
  %v26 = vld [vmem:[%s0 + $0x8] sm:$0xf]
  %v27 = vld [vmem:[%s0 + $0xc] sm:$0xf]
  %v28 = vld [vmem:[%s0 + $0x10] sm:$0xf]
  %v29 = vld [vmem:[%s0 + $0x14] sm:$0xf]
  %v30 = vld [vmem:[%s0 + $0x18] sm:$0xf]
  %v31 = vld [vmem:[%s0 + $0x1c] sm:$0xf]
  %v32 = vld [vmem:[%s0 + $0x20] sm:$0xf]
  %v33 = vld [vmem:[%s0 + $0x24] sm:$0xf]
  %v34 = vld [vmem:[%s0 + $0x28] sm:$0xf]
  %v35 = vld [vmem:[%s0 + $0x2c] sm:$0xf]
  %v36 = vld [vmem:[%s0 + $0x30] sm:$0xf]
  %v37 = vld [vmem:[%s0 + $0x34] sm:$0xf]
  %v38 = vld [vmem:[%s0 + $0x38] sm:$0xf]
  %v39 = vld [vmem:[%s0 + $0x3c] sm:$0xf]
  %v40 = vunpack.c.l.bf16 %v24
  %v41 = vunpack.c.l.bf16 %v25
  %v42 = vunpack.c.l.bf16 %v26
  %v43 = vunpack.c.l.bf16 %v27
  %v44 = vunpack.c.l.bf16 %v28
  %v45 = vunpack.c.l.bf16 %v29
  %v46 = vunpack.c.l.bf16 %v30
  %v47 = vunpack.c.l.bf16 %v31
  %v48 = vunpack.c.l.bf16 %v32
  %v49 = vunpack.c.l.bf16 %v33
  %v50 = vunpack.c.l.bf16 %v34
  %v51 = vunpack.c.l.bf16 %v35
  %v52 = vunpack.c.l.bf16 %v36
  %v53 = vunpack.c.l.bf16 %v37
  %v54 = vunpack.c.l.bf16 %v38
  %v55 = vunpack.c.l.bf16 %v39
  %v56 = vld [vmem:[%s1] sm:$0xff]
  %v57 = vld [vmem:[%s1 + $0x8] sm:$0xff]
  %v58 = vld [vmem:[%s1 + $0x10] sm:$0xff]
  %v59 = vld [vmem:[%s1 + $0x18] sm:$0xff]
  %v60 = vld [vmem:[%s1 + $0x20] sm:$0xff]
  %v61 = vld [vmem:[%s1 + $0x28] sm:$0xff]
  %v62 = vld [vmem:[%s1 + $0x30] sm:$0xff]
  %v63 = vld [vmem:[%s1 + $0x38] sm:$0xff]
  %v64 = vld [vmem:[%s1 + $0x40] sm:$0xff]
  %v65 = vld [vmem:[%s1 + $0x48] sm:$0xff]
  %v66 = vld [vmem:[%s1 + $0x50] sm:$0xff]
  %v67 = vld [vmem:[%s1 + $0x58] sm:$0xff]
  %v68 = vld [vmem:[%s1 + $0x60] sm:$0xff]
  %v69 = vld [vmem:[%s1 + $0x68] sm:$0xff]
  %v70 = vld [vmem:[%s1 + $0x70] sm:$0xff]
  %v71 = vld [vmem:[%s1 + $0x78] sm:$0xff]
  %v72 = vld [vmem:[%s5] sm:$0xff]
  %v73 = vld [vmem:[%s5 + $0x8] sm:$0x7]
  %v74 = vrot.slane %v40, 7
  %v75 = vrot.slane %v41, 7
  %v76 = vrot.slane %v42, 7
  %v77 = vrot.slane %v43, 7
  %v78 = vrot.slane %v44, 7
  %v79 = vrot.slane %v45, 7
  %v80 = vrot.slane %v46, 7
  %v81 = vrot.slane %v47, 7
  %v82 = vrot.slane %v48, 7
  %v83 = vrot.slane %v49, 7
  %v84 = vrot.slane %v50, 7
  %v85 = vrot.slane %v51, 7
  %v86 = vrot.slane %v52, 7
  %v87 = vrot.slane %v53, 7
  %v88 = vrot.slane %v54, 7
  %v89 = vrot.slane %v55, 7
  %v90 = vlaneseq
  %v91 = vshrl.u32 %v90, 7
  %vm92 = vcmp.lt.s32.totalorder %v91, 1
  %v93 = vsel %vm92, %v88, %v89
  %v94 = vsel %vm92, %v87, %v88
  %v95 = vsel %vm92, %v86, %v87
  %v96 = vsel %vm92, %v85, %v86
  %v97 = vsel %vm92, %v84, %v85
  %v98 = vsel %vm92, %v83, %v84
  %v99 = vsel %vm92, %v82, %v83
  %v100 = vsel %vm92, %v81, %v82
  %v101 = vsel %vm92, %v80, %v81
  %v102 = vsel %vm92, %v79, %v80
  %v103 = vsel %vm92, %v78, %v79
  %v104 = vsel %vm92, %v77, %v78
  %v105 = vsel %vm92, %v76, %v77
  %v106 = vsel %vm92, %v75, %v76
  %v107 = vsel %vm92, %v74, %v75
  %v108 = vsel %vm92, %v89, %v74
  %110 = vset.pattern.permute.xlu0 0
  %111 = vperm.xlu0 %110, %v56
  %v112 = vpop.permute.xlu0 %111
  %115 = vset.pattern.permute.xlu0 0
  %116 = vperm.xlu0 %115, %v57
  %v117 = vpop.permute.xlu0 %116
  %120 = vset.pattern.permute.xlu0 0
  %121 = vperm.xlu0 %120, %v58
  %v122 = vpop.permute.xlu0 %121
  %125 = vset.pattern.permute.xlu0 0
  %126 = vperm.xlu0 %125, %v59
  %v127 = vpop.permute.xlu0 %126
  %130 = vset.pattern.permute.xlu0 0
  %131 = vperm.xlu0 %130, %v60
  %v132 = vpop.permute.xlu0 %131
  %135 = vset.pattern.permute.xlu0 0
  %136 = vperm.xlu0 %135, %v61
  %v137 = vpop.permute.xlu0 %136
  %140 = vset.pattern.permute.xlu0 0
  %141 = vperm.xlu0 %140, %v62
  %v142 = vpop.permute.xlu0 %141
  %145 = vset.pattern.permute.xlu0 0
  %146 = vperm.xlu0 %145, %v63
  %v147 = vpop.permute.xlu0 %146
  %150 = vset.pattern.permute.xlu0 0
  %151 = vperm.xlu0 %150, %v64
  %v152 = vpop.permute.xlu0 %151
  %155 = vset.pattern.permute.xlu0 0
  %156 = vperm.xlu0 %155, %v65
  %v157 = vpop.permute.xlu0 %156
  %160 = vset.pattern.permute.xlu0 0
  %161 = vperm.xlu0 %160, %v66
  %v162 = vpop.permute.xlu0 %161
  %165 = vset.pattern.permute.xlu0 0
  %166 = vperm.xlu0 %165, %v67
  %v167 = vpop.permute.xlu0 %166
  %170 = vset.pattern.permute.xlu0 0
  %171 = vperm.xlu0 %170, %v68
  %v172 = vpop.permute.xlu0 %171
  %175 = vset.pattern.permute.xlu0 0
  %176 = vperm.xlu0 %175, %v69
  %v177 = vpop.permute.xlu0 %176
  %180 = vset.pattern.permute.xlu0 0
  %181 = vperm.xlu0 %180, %v70
  %v182 = vpop.permute.xlu0 %181
  %185 = vset.pattern.permute.xlu0 0
  %186 = vperm.xlu0 %185, %v71
  %v187 = vpop.permute.xlu0 %186
  %v189 = vmul.f32 %v108, %v112
  %v190 = vmul.f32 %v107, %v117
  %v191 = vmul.f32 %v106, %v122
  %v192 = vmul.f32 %v105, %v127
  %v193 = vmul.f32 %v104, %v132
  %v194 = vmul.f32 %v103, %v137
  %v195 = vmul.f32 %v102, %v142
  %v196 = vmul.f32 %v101, %v147
  %v197 = vmul.f32 %v100, %v152
  %v198 = vmul.f32 %v99, %v157
  %v199 = vmul.f32 %v98, %v162
  %v200 = vmul.f32 %v97, %v167
  %v201 = vmul.f32 %v96, %v172
  %v202 = vmul.f32 %v95, %v177
  %v203 = vmul.f32 %v94, %v182
  %v204 = vmul.f32 %v93, %v187
  %v205 = vrot.slane %v40, 1
  %v206 = vrot.slane %v41, 1
  %v207 = vrot.slane %v42, 1
  %v208 = vrot.slane %v43, 1
  %v209 = vrot.slane %v44, 1
  %v210 = vrot.slane %v45, 1
  %v211 = vrot.slane %v46, 1
  %v212 = vrot.slane %v47, 1
  %v213 = vrot.slane %v48, 1
  %v214 = vrot.slane %v49, 1
  %v215 = vrot.slane %v50, 1
  %v216 = vrot.slane %v51, 1
  %v217 = vrot.slane %v52, 1
  %v218 = vrot.slane %v53, 1
  %v219 = vrot.slane %v54, 1
  %v220 = vrot.slane %v55, 1
  %vm221 = vcmp.lt.s32.totalorder %v91, 7
  %v222 = vsel %vm221, %v219, %v220
  %v223 = vsel %vm221, %v218, %v219
  %v224 = vsel %vm221, %v217, %v218
  %v225 = vsel %vm221, %v216, %v217
  %v226 = vsel %vm221, %v215, %v216
  %v227 = vsel %vm221, %v214, %v215
  %v228 = vsel %vm221, %v213, %v214
  %v229 = vsel %vm221, %v212, %v213
  %v230 = vsel %vm221, %v211, %v212
  %v231 = vsel %vm221, %v210, %v211
  %v232 = vsel %vm221, %v209, %v210
  %v233 = vsel %vm221, %v208, %v209
  %v234 = vsel %vm221, %v207, %v208
  %v235 = vsel %vm221, %v206, %v207
  %v236 = vsel %vm221, %v205, %v206
  %v237 = vsel %vm221, %v220, %v205
  %238 = vset.pattern.permute.xlu0 1
  %239 = vperm.xlu0 %238, %v56
  %v240 = vpop.permute.xlu0 %239
  %242 = vset.pattern.permute.xlu0 1
  %243 = vperm.xlu0 %242, %v57
  %v244 = vpop.permute.xlu0 %243
  %246 = vset.pattern.permute.xlu0 1
  %247 = vperm.xlu0 %246, %v58
  %v248 = vpop.permute.xlu0 %247
  %250 = vset.pattern.permute.xlu0 1
  %251 = vperm.xlu0 %250, %v59
  %v252 = vpop.permute.xlu0 %251
  %254 = vset.pattern.permute.xlu0 1
  %255 = vperm.xlu0 %254, %v60
  %v256 = vpop.permute.xlu0 %255
  %258 = vset.pattern.permute.xlu0 1
  %259 = vperm.xlu0 %258, %v61
  %v260 = vpop.permute.xlu0 %259
  %262 = vset.pattern.permute.xlu0 1
  %263 = vperm.xlu0 %262, %v62
  %v264 = vpop.permute.xlu0 %263
  %266 = vset.pattern.permute.xlu0 1
  %267 = vperm.xlu0 %266, %v63
  %v268 = vpop.permute.xlu0 %267
  %270 = vset.pattern.permute.xlu0 1
  %271 = vperm.xlu0 %270, %v64
  %v272 = vpop.permute.xlu0 %271
  %274 = vset.pattern.permute.xlu0 1
  %275 = vperm.xlu0 %274, %v65
  %v276 = vpop.permute.xlu0 %275
  %278 = vset.pattern.permute.xlu0 1
  %279 = vperm.xlu0 %278, %v66
  %v280 = vpop.permute.xlu0 %279
  %282 = vset.pattern.permute.xlu0 1
  %283 = vperm.xlu0 %282, %v67
  %v284 = vpop.permute.xlu0 %283
  %286 = vset.pattern.permute.xlu0 1
  %287 = vperm.xlu0 %286, %v68
  %v288 = vpop.permute.xlu0 %287
  %290 = vset.pattern.permute.xlu0 1
  %291 = vperm.xlu0 %290, %v69
  %v292 = vpop.permute.xlu0 %291
  %294 = vset.pattern.permute.xlu0 1
  %295 = vperm.xlu0 %294, %v70
  %v296 = vpop.permute.xlu0 %295
  %298 = vset.pattern.permute.xlu0 1
  %299 = vperm.xlu0 %298, %v71
  %v300 = vpop.permute.xlu0 %299
  %v302 = vmul.f32 %v236, %v240
  %v303 = vmul.f32 %v235, %v244
  %v304 = vmul.f32 %v234, %v248
  %v305 = vmul.f32 %v233, %v252
  %v306 = vmul.f32 %v232, %v256
  %v307 = vmul.f32 %v231, %v260
  %v308 = vmul.f32 %v230, %v264
  %v309 = vmul.f32 %v229, %v268
  %v310 = vmul.f32 %v228, %v272
  %v311 = vmul.f32 %v227, %v276
  %v312 = vmul.f32 %v226, %v280
  %v313 = vmul.f32 %v225, %v284
  %v314 = vmul.f32 %v224, %v288
  %v315 = vmul.f32 %v223, %v292
  %v316 = vmul.f32 %v222, %v296
  %v317 = vmul.f32 %v237, %v300
  %334 = vrot.lane.b32.xlu0 %v40, 8
  %v335 = vpop.permute.xlu0 %334
  %336 = vrot.lane.b32.xlu0 %v41, 8
  %v337 = vpop.permute.xlu0 %336
  %338 = vrot.lane.b32.xlu0 %v42, 8
  %v339 = vpop.permute.xlu0 %338
  %340 = vrot.lane.b32.xlu0 %v43, 8
  %v341 = vpop.permute.xlu0 %340
  %342 = vrot.lane.b32.xlu0 %v44, 8
  %v343 = vpop.permute.xlu0 %342
  %344 = vrot.lane.b32.xlu0 %v45, 8
  %v345 = vpop.permute.xlu0 %344
  %346 = vrot.lane.b32.xlu0 %v46, 8
  %v347 = vpop.permute.xlu0 %346
  %348 = vrot.lane.b32.xlu0 %v47, 8
  %v349 = vpop.permute.xlu0 %348
  %350 = vrot.lane.b32.xlu0 %v48, 8
  %v351 = vpop.permute.xlu0 %350
  %352 = vrot.lane.b32.xlu0 %v49, 8
  %v353 = vpop.permute.xlu0 %352
  %354 = vrot.lane.b32.xlu0 %v50, 8
  %v355 = vpop.permute.xlu0 %354
  %356 = vrot.lane.b32.xlu0 %v51, 8
  %v357 = vpop.permute.xlu0 %356
  %358 = vrot.lane.b32.xlu0 %v52, 8
  %v359 = vpop.permute.xlu0 %358
  %360 = vrot.lane.b32.xlu0 %v53, 8
  %v361 = vpop.permute.xlu0 %360
  %362 = vrot.lane.b32.xlu0 %v54, 8
  %v363 = vpop.permute.xlu0 %362
  %364 = vrot.lane.b32.xlu0 %v55, 8
  %v365 = vpop.permute.xlu0 %364
  %398 = vrot.lane.b32.xlu0 %v302, 16
  %v399 = vpop.permute.xlu0 %398
  %400 = vrot.lane.b32.xlu0 %v303, 16
  %v401 = vpop.permute.xlu0 %400
  %402 = vrot.lane.b32.xlu0 %v304, 16
  %v403 = vpop.permute.xlu0 %402
  %404 = vrot.lane.b32.xlu0 %v305, 16
  %v405 = vpop.permute.xlu0 %404
  %406 = vrot.lane.b32.xlu0 %v306, 16
  %v407 = vpop.permute.xlu0 %406
  %408 = vrot.lane.b32.xlu0 %v307, 16
  %v409 = vpop.permute.xlu0 %408
  %410 = vrot.lane.b32.xlu0 %v308, 16
  %v411 = vpop.permute.xlu0 %410
  %412 = vrot.lane.b32.xlu0 %v309, 16
  %v413 = vpop.permute.xlu0 %412
  %414 = vrot.lane.b32.xlu0 %v310, 16
  %v415 = vpop.permute.xlu0 %414
  %416 = vrot.lane.b32.xlu0 %v311, 16
  %v417 = vpop.permute.xlu0 %416
  %418 = vrot.lane.b32.xlu0 %v312, 16
  %v419 = vpop.permute.xlu0 %418
  %420 = vrot.lane.b32.xlu0 %v313, 16
  %v421 = vpop.permute.xlu0 %420
  %422 = vrot.lane.b32.xlu0 %v314, 16
  %v423 = vpop.permute.xlu0 %422
  %424 = vrot.lane.b32.xlu0 %v315, 16
  %v425 = vpop.permute.xlu0 %424
  %426 = vrot.lane.b32.xlu0 %v316, 16
  %v427 = vpop.permute.xlu0 %426
  %428 = vrot.lane.b32.xlu0 %v317, 16
  %v429 = vpop.permute.xlu0 %428
  %vm446 = vcmask 64512
  %v447 = vsel %vm446, %v189, %v335
  %v448 = vsel %vm446, %v190, %v337
  %v449 = vsel %vm446, %v191, %v339
  %v450 = vsel %vm446, %v192, %v341
  %v451 = vsel %vm446, %v193, %v343
  %v452 = vsel %vm446, %v194, %v345
  %v453 = vsel %vm446, %v195, %v347
  %v454 = vsel %vm446, %v196, %v349
  %v455 = vsel %vm446, %v197, %v351
  %v456 = vsel %vm446, %v198, %v353
  %v457 = vsel %vm446, %v199, %v355
  %v458 = vsel %vm446, %v200, %v357
  %v459 = vsel %vm446, %v201, %v359
  %v460 = vsel %vm446, %v202, %v361
  %v461 = vsel %vm446, %v203, %v363
  %v462 = vsel %vm446, %v204, %v365
  %vm463 = vcmask 130048
  %v464 = vsel %vm463, %v447, %v399
  %v465 = vsel %vm463, %v448, %v401
  %v466 = vsel %vm463, %v449, %v403
  %v467 = vsel %vm463, %v450, %v405
  %v468 = vsel %vm463, %v451, %v407
  %v469 = vsel %vm463, %v452, %v409
  %v470 = vsel %vm463, %v453, %v411
  %v471 = vsel %vm463, %v454, %v413
  %v472 = vsel %vm463, %v455, %v415
  %v473 = vsel %vm463, %v456, %v417
  %v474 = vsel %vm463, %v457, %v419
  %v475 = vsel %vm463, %v458, %v421
  %v476 = vsel %vm463, %v459, %v423
  %v477 = vsel %vm463, %v460, %v425
  %v478 = vsel %vm463, %v461, %v427
  %v479 = vsel %vm463, %v462, %v429
  %v480 = vpack.c.bf16 %v465, %v464
  %v481 = vpack.c.bf16 %v467, %v466
  %v482 = vpack.c.bf16 %v469, %v468
  %v483 = vpack.c.bf16 %v471, %v470
  %v484 = vpack.c.bf16 %v473, %v472
  %v485 = vpack.c.bf16 %v475, %v474
  %v486 = vpack.c.bf16 %v477, %v476
  %v487 = vpack.c.bf16 %v479, %v478
  %v488 = vld [vmem:[%s2] sm:$0xf]
  %v489 = vld [vmem:[%s2 + $0x4] sm:$0xf]
  %v490 = vld [vmem:[%s2 + $0x8] sm:$0xf]
  %v491 = vlaneseq
  %v492 = vshrl.u32 %v491, 7
  %v493 = vsub.s32 0, %v492
  %v494 = vrot.slane %v72, %v493
  %v498 = vunpack.c.l.b16 %v488
  %v499 = vunpack.c.l.b16 %v489
  %v500 = vunpack.c.l.b16 %v490
  %v501 = vpack.c.b16 %v499, %v498
  %v502 = vpack.c.b16 %v500, %v500
  %vm504 = vcmask 195584
  %v506 = vsel %vm504, %v480, 0
  %v509 = vsel %vm504, %v481, 0
  %v512 = vsel %vm504, %v482, 0
  %v515 = vsel %vm504, %v483, 0
  %v518 = vsel %vm504, %v484, 0
  %v521 = vsel %vm504, %v485, 0
  %v524 = vsel %vm504, %v486, 0
  %v527 = vsel %vm504, %v487, 0
  %vm529 = vcmask 1043456
  %v531 = vsel %vm529, %v502, 0
  %533 = vmatprep.subr.bf16.mxu0 0
  %534 = vmatpush1.bf16.msra.mxu0 0
  %535 = vmatprep.subr.bf16.mxu0 0
  %536 = vmatpush1.bf16.msra.mxu0 0
  %537 = vmatprep.subr.bf16.mxu0 0
  %538 = vmatpush1.bf16.msra.mxu0 0
  %539 = vmatprep.subr.bf16.mxu0 0
  %540 = vmatpush1.bf16.msra.mxu0 0
  %541 = vmatprep.subr.bf16.mxu0 0
  %542 = vmatpush1.bf16.msra.mxu0 0
  %543 = vmatprep.subr.bf16.mxu0 0
  %544 = vmatpush1.bf16.msra.mxu0 0
  %545 = vmatprep.subr.bf16.mxu0 0
  %546 = vmatpush1.bf16.msra.mxu0 %v531
  %547 = vmatprep.subr.bf16.mxu0 0
  %548 = vmatpush1.bf16.msra.mxu0 %v501
  %549 = vmatprep.subr.bf16.mxu0 0
  %550 = vmatpush2.bf16.msra.mxu0 0
  %551 = vmatprep.subr.bf16.mxu0 0
  %552 = vmatpush2.bf16.msra.mxu0 0
  %553 = vmatprep.subr.bf16.mxu0 0
  %554 = vmatpush2.bf16.msra.mxu0 0
  %555 = vmatprep.subr.bf16.mxu0 0
  %556 = vmatpush2.bf16.msra.mxu0 0
  %557 = vmatprep.subr.bf16.mxu0 0
  %558 = vmatpush2.bf16.msra.mxu0 0
  %559 = vmatprep.subr.bf16.mxu0 0
  %560 = vmatpush2.bf16.msra.mxu0 0
  %561 = vmatprep.subr.bf16.mxu0 0
  %562 = vmatpush2.bf16.msra.mxu0 0
  %563 = vmatprep.subr.bf16.mxu0 0
  %564 = vmatpush2.bf16.msra.mxu0 0
  %565 = vmatprep.mubr.bf16.mxu0 0
  %566 = vmatmul.mubr.bf16.gmra.mxu0 %v506
  %v567 = vpop.f32.mrf.mxu0
  %v568 = vadd.f32 %v494, %v567
  %v569 = vpop.f32.mrf.mxu0
  %v570 = vpop.f32.mrf.mxu0
  %v571 = vadd.f32 %v494, %v570
  %v572 = vpop.f32.mrf.mxu0
  %573 = vmatprep.mubr.bf16.mxu0 0
  %574 = vmatmul.mubr.bf16.gmra.mxu0 %v509
  %v575 = vpop.f32.mrf.mxu0
  %v576 = vadd.f32 %v494, %v575
  %v577 = vpop.f32.mrf.mxu0
  %v578 = vpop.f32.mrf.mxu0
  %v579 = vadd.f32 %v494, %v578
  %v580 = vpop.f32.mrf.mxu0
  %581 = vmatprep.mubr.bf16.mxu0 0
  %582 = vmatmul.mubr.bf16.gmra.mxu0 %v512
  %v583 = vpop.f32.mrf.mxu0
  %v584 = vadd.f32 %v494, %v583
  %v585 = vpop.f32.mrf.mxu0
  %v586 = vpop.f32.mrf.mxu0
  %v587 = vadd.f32 %v494, %v586
  %v588 = vpop.f32.mrf.mxu0
  %589 = vmatprep.mubr.bf16.mxu0 0
  %590 = vmatmul.mubr.bf16.gmra.mxu0 %v515
  %v591 = vpop.f32.mrf.mxu0
  %v592 = vadd.f32 %v494, %v591
  %v593 = vpop.f32.mrf.mxu0
  %v594 = vpop.f32.mrf.mxu0
  %v595 = vadd.f32 %v494, %v594
  %v596 = vpop.f32.mrf.mxu0
  %597 = vmatprep.mubr.bf16.mxu0 0
  %598 = vmatmul.mubr.bf16.gmra.mxu0 %v518
  %v599 = vpop.f32.mrf.mxu0
  %v600 = vadd.f32 %v494, %v599
  %v601 = vpop.f32.mrf.mxu0
  %v602 = vpop.f32.mrf.mxu0
  %v603 = vadd.f32 %v494, %v602
  %v604 = vpop.f32.mrf.mxu0
  %605 = vmatprep.mubr.bf16.mxu0 0
  %606 = vmatmul.mubr.bf16.gmra.mxu0 %v521
  %v607 = vpop.f32.mrf.mxu0
  %v608 = vadd.f32 %v494, %v607
  %v609 = vpop.f32.mrf.mxu0
  %v610 = vpop.f32.mrf.mxu0
  %v611 = vadd.f32 %v494, %v610
  %v612 = vpop.f32.mrf.mxu0
  %613 = vmatprep.mubr.bf16.mxu0 0
  %614 = vmatmul.mubr.bf16.gmra.mxu0 %v524
  %v615 = vpop.f32.mrf.mxu0
  %v616 = vadd.f32 %v494, %v615
  %v617 = vpop.f32.mrf.mxu0
  %v618 = vpop.f32.mrf.mxu0
  %v619 = vadd.f32 %v494, %v618
  %v620 = vpop.f32.mrf.mxu0
  %621 = vmatprep.mubr.bf16.mxu0 0
  %622 = vmatmul.mubr.bf16.gmra.mxu0 %v527
  %v623 = vpop.f32.mrf.mxu0
  %v624 = vadd.f32 %v494, %v623
  %v625 = vpop.f32.mrf.mxu0
  %v626 = vpop.f32.mrf.mxu0
  %v627 = vadd.f32 %v494, %v626
  %v628 = vpop.f32.mrf.mxu0
  %629 = vdwg.mxu0
  %v630 = vmax.f32 %v568, 0.0
  %v631 = vmax.f32 %v571, 0.0
  %v632 = vmax.f32 %v576, 0.0
  %v633 = vmax.f32 %v579, 0.0
  %v634 = vmax.f32 %v584, 0.0
  %v635 = vmax.f32 %v587, 0.0
  %v636 = vmax.f32 %v592, 0.0
  %v637 = vmax.f32 %v595, 0.0
  %v638 = vmax.f32 %v600, 0.0
  %v639 = vmax.f32 %v603, 0.0
  %v640 = vmax.f32 %v608, 0.0
  %v641 = vmax.f32 %v611, 0.0
  %v642 = vmax.f32 %v616, 0.0
  %v643 = vmax.f32 %v619, 0.0
  %v644 = vmax.f32 %v624, 0.0
  %v645 = vmax.f32 %v627, 0.0
  %v646 = vlaneseq
  %v647 = vshrl.u32 %v646, 7
  %v648 = vsub.s32 1, %v647
  %v649 = vrot.slane %v72, %v648
  %v650 = vmul.f32 %v630, %v649
  %v651 = vmul.f32 %v631, %v649
  %v652 = vmul.f32 %v632, %v649
  %v653 = vmul.f32 %v633, %v649
  %v654 = vmul.f32 %v634, %v649
  %v655 = vmul.f32 %v635, %v649
  %v656 = vmul.f32 %v636, %v649
  %v657 = vmul.f32 %v637, %v649
  %v658 = vmul.f32 %v638, %v649
  %v659 = vmul.f32 %v639, %v649
  %v660 = vmul.f32 %v640, %v649
  %v661 = vmul.f32 %v641, %v649
  %v662 = vmul.f32 %v642, %v649
  %v663 = vmul.f32 %v643, %v649
  %v664 = vmul.f32 %v644, %v649
  %v665 = vmul.f32 %v645, %v649
  %v666 = vlaneseq
  %v667 = vshrl.u32 %v666, 7
  %v668 = vsub.s32 2, %v667
  %v669 = vrot.slane %v72, %v668
  %v670 = vadd.f32 %v650, %v669
  %v671 = vadd.f32 %v651, %v669
  %v672 = vadd.f32 %v652, %v669
  %v673 = vadd.f32 %v653, %v669
  %v674 = vadd.f32 %v654, %v669
  %v675 = vadd.f32 %v655, %v669
  %v676 = vadd.f32 %v656, %v669
  %v677 = vadd.f32 %v657, %v669
  %v678 = vadd.f32 %v658, %v669
  %v679 = vadd.f32 %v659, %v669
  %v680 = vadd.f32 %v660, %v669
  %v681 = vadd.f32 %v661, %v669
  %v682 = vadd.f32 %v662, %v669
  %v683 = vadd.f32 %v663, %v669
  %v684 = vadd.f32 %v664, %v669
  %v685 = vadd.f32 %v665, %v669
  %v686 = vrot.slane %v670, 7
  %v687 = vrot.slane %v671, 7
  %v688 = vrot.slane %v672, 7
  %v689 = vrot.slane %v673, 7
  %v690 = vrot.slane %v674, 7
  %v691 = vrot.slane %v675, 7
  %v692 = vrot.slane %v676, 7
  %v693 = vrot.slane %v677, 7
  %v694 = vrot.slane %v678, 7
  %v695 = vrot.slane %v679, 7
  %v696 = vrot.slane %v680, 7
  %v697 = vrot.slane %v681, 7
  %v698 = vrot.slane %v682, 7
  %v699 = vrot.slane %v683, 7
  %v700 = vrot.slane %v684, 7
  %v701 = vrot.slane %v685, 7
  %v702 = vsel %vm92, %v700, %v701
  %v703 = vsel %vm92, %v699, %v700
  %v704 = vsel %vm92, %v698, %v699
  %v705 = vsel %vm92, %v697, %v698
  %v706 = vsel %vm92, %v696, %v697
  %v707 = vsel %vm92, %v695, %v696
  %v708 = vsel %vm92, %v694, %v695
  %v709 = vsel %vm92, %v693, %v694
  %v710 = vsel %vm92, %v692, %v693
  %v711 = vsel %vm92, %v691, %v692
  %v712 = vsel %vm92, %v690, %v691
  %v713 = vsel %vm92, %v689, %v690
  %v714 = vsel %vm92, %v688, %v689
  %v715 = vsel %vm92, %v687, %v688
  %v716 = vsel %vm92, %v686, %v687
  %v717 = vsel %vm92, %v701, %v686
  %v718 = vmul.f32 %v717, %v112
  %v719 = vmul.f32 %v716, %v117
  %v720 = vmul.f32 %v715, %v122
  %v721 = vmul.f32 %v714, %v127
  %v722 = vmul.f32 %v713, %v132
  %v723 = vmul.f32 %v712, %v137
  %v724 = vmul.f32 %v711, %v142
  %v725 = vmul.f32 %v710, %v147
  %v726 = vmul.f32 %v709, %v152
  %v727 = vmul.f32 %v708, %v157
  %v728 = vmul.f32 %v707, %v162
  %v729 = vmul.f32 %v706, %v167
  %v730 = vmul.f32 %v705, %v172
  %v731 = vmul.f32 %v704, %v177
  %v732 = vmul.f32 %v703, %v182
  %v733 = vmul.f32 %v702, %v187
  %v734 = vrot.slane %v670, 1
  %v735 = vrot.slane %v671, 1
  %v736 = vrot.slane %v672, 1
  %v737 = vrot.slane %v673, 1
  %v738 = vrot.slane %v674, 1
  %v739 = vrot.slane %v675, 1
  %v740 = vrot.slane %v676, 1
  %v741 = vrot.slane %v677, 1
  %v742 = vrot.slane %v678, 1
  %v743 = vrot.slane %v679, 1
  %v744 = vrot.slane %v680, 1
  %v745 = vrot.slane %v681, 1
  %v746 = vrot.slane %v682, 1
  %v747 = vrot.slane %v683, 1
  %v748 = vrot.slane %v684, 1
  %v749 = vrot.slane %v685, 1
  %v750 = vsel %vm221, %v748, %v749
  %v751 = vsel %vm221, %v747, %v748
  %v752 = vsel %vm221, %v746, %v747
  %v753 = vsel %vm221, %v745, %v746
  %v754 = vsel %vm221, %v744, %v745
  %v755 = vsel %vm221, %v743, %v744
  %v756 = vsel %vm221, %v742, %v743
  %v757 = vsel %vm221, %v741, %v742
  %v758 = vsel %vm221, %v740, %v741
  %v759 = vsel %vm221, %v739, %v740
  %v760 = vsel %vm221, %v738, %v739
  %v761 = vsel %vm221, %v737, %v738
  %v762 = vsel %vm221, %v736, %v737
  %v763 = vsel %vm221, %v735, %v736
  %v764 = vsel %vm221, %v734, %v735
  %v765 = vsel %vm221, %v749, %v734
  %v766 = vmul.f32 %v764, %v240
  %v767 = vmul.f32 %v763, %v244
  %v768 = vmul.f32 %v762, %v248
  %v769 = vmul.f32 %v761, %v252
  %v770 = vmul.f32 %v760, %v256
  %v771 = vmul.f32 %v759, %v260
  %v772 = vmul.f32 %v758, %v264
  %v773 = vmul.f32 %v757, %v268
  %v774 = vmul.f32 %v756, %v272
  %v775 = vmul.f32 %v755, %v276
  %v776 = vmul.f32 %v754, %v280
  %v777 = vmul.f32 %v753, %v284
  %v778 = vmul.f32 %v752, %v288
  %v779 = vmul.f32 %v751, %v292
  %v780 = vmul.f32 %v750, %v296
  %v781 = vmul.f32 %v765, %v300
  %798 = vrot.lane.b32.xlu0 %v670, 32
  %v799 = vpop.permute.xlu0 %798
  %800 = vrot.lane.b32.xlu0 %v671, 32
  %v801 = vpop.permute.xlu0 %800
  %802 = vrot.lane.b32.xlu0 %v672, 32
  %v803 = vpop.permute.xlu0 %802
  %804 = vrot.lane.b32.xlu0 %v673, 32
  %v805 = vpop.permute.xlu0 %804
  %806 = vrot.lane.b32.xlu0 %v674, 32
  %v807 = vpop.permute.xlu0 %806
  %808 = vrot.lane.b32.xlu0 %v675, 32
  %v809 = vpop.permute.xlu0 %808
  %810 = vrot.lane.b32.xlu0 %v676, 32
  %v811 = vpop.permute.xlu0 %810
  %812 = vrot.lane.b32.xlu0 %v677, 32
  %v813 = vpop.permute.xlu0 %812
  %814 = vrot.lane.b32.xlu0 %v678, 32
  %v815 = vpop.permute.xlu0 %814
  %816 = vrot.lane.b32.xlu0 %v679, 32
  %v817 = vpop.permute.xlu0 %816
  %818 = vrot.lane.b32.xlu0 %v680, 32
  %v819 = vpop.permute.xlu0 %818
  %820 = vrot.lane.b32.xlu0 %v681, 32
  %v821 = vpop.permute.xlu0 %820
  %822 = vrot.lane.b32.xlu0 %v682, 32
  %v823 = vpop.permute.xlu0 %822
  %824 = vrot.lane.b32.xlu0 %v683, 32
  %v825 = vpop.permute.xlu0 %824
  %826 = vrot.lane.b32.xlu0 %v684, 32
  %v827 = vpop.permute.xlu0 %826
  %828 = vrot.lane.b32.xlu0 %v685, 32
  %v829 = vpop.permute.xlu0 %828
  %862 = vrot.lane.b32.xlu0 %v766, 64
  %v863 = vpop.permute.xlu0 %862
  %864 = vrot.lane.b32.xlu0 %v767, 64
  %v865 = vpop.permute.xlu0 %864
  %866 = vrot.lane.b32.xlu0 %v768, 64
  %v867 = vpop.permute.xlu0 %866
  %868 = vrot.lane.b32.xlu0 %v769, 64
  %v869 = vpop.permute.xlu0 %868
  %870 = vrot.lane.b32.xlu0 %v770, 64
  %v871 = vpop.permute.xlu0 %870
  %872 = vrot.lane.b32.xlu0 %v771, 64
  %v873 = vpop.permute.xlu0 %872
  %874 = vrot.lane.b32.xlu0 %v772, 64
  %v875 = vpop.permute.xlu0 %874
  %876 = vrot.lane.b32.xlu0 %v773, 64
  %v877 = vpop.permute.xlu0 %876
  %878 = vrot.lane.b32.xlu0 %v774, 64
  %v879 = vpop.permute.xlu0 %878
  %880 = vrot.lane.b32.xlu0 %v775, 64
  %v881 = vpop.permute.xlu0 %880
  %882 = vrot.lane.b32.xlu0 %v776, 64
  %v883 = vpop.permute.xlu0 %882
  %884 = vrot.lane.b32.xlu0 %v777, 64
  %v885 = vpop.permute.xlu0 %884
  %886 = vrot.lane.b32.xlu0 %v778, 64
  %v887 = vpop.permute.xlu0 %886
  %888 = vrot.lane.b32.xlu0 %v779, 64
  %v889 = vpop.permute.xlu0 %888
  %890 = vrot.lane.b32.xlu0 %v780, 64
  %v891 = vpop.permute.xlu0 %890
  %892 = vrot.lane.b32.xlu0 %v781, 64
  %v893 = vpop.permute.xlu0 %892
  %vm910 = vcmask 261120
  %v911 = vsel %vm910, %v718, %v799
  %v912 = vsel %vm910, %v719, %v801
  %v913 = vsel %vm910, %v720, %v803
  %v914 = vsel %vm910, %v721, %v805
  %v915 = vsel %vm910, %v722, %v807
  %v916 = vsel %vm910, %v723, %v809
  %v917 = vsel %vm910, %v724, %v811
  %v918 = vsel %vm910, %v725, %v813
  %v919 = vsel %vm910, %v726, %v815
  %v920 = vsel %vm910, %v727, %v817
  %v921 = vsel %vm910, %v728, %v819
  %v922 = vsel %vm910, %v729, %v821
  %v923 = vsel %vm910, %v730, %v823
  %v924 = vsel %vm910, %v731, %v825
  %v925 = vsel %vm910, %v732, %v827
  %v926 = vsel %vm910, %v733, %v829
  %vm927 = vcmask 523264
  %v928 = vsel %vm927, %v911, %v863
  %v929 = vsel %vm927, %v912, %v865
  %v930 = vsel %vm927, %v913, %v867
  %v931 = vsel %vm927, %v914, %v869
  %v932 = vsel %vm927, %v915, %v871
  %v933 = vsel %vm927, %v916, %v873
  %v934 = vsel %vm927, %v917, %v875
  %v935 = vsel %vm927, %v918, %v877
  %v936 = vsel %vm927, %v919, %v879
  %v937 = vsel %vm927, %v920, %v881
  %v938 = vsel %vm927, %v921, %v883
  %v939 = vsel %vm927, %v922, %v885
  %v940 = vsel %vm927, %v923, %v887
  %v941 = vsel %vm927, %v924, %v889
  %v942 = vsel %vm927, %v925, %v891
  %v943 = vsel %vm927, %v926, %v893
  %v944 = vpack.c.bf16 %v929, %v928
  %v945 = vpack.c.bf16 %v931, %v930
  %v946 = vpack.c.bf16 %v933, %v932
  %v947 = vpack.c.bf16 %v935, %v934
  %v948 = vpack.c.bf16 %v937, %v936
  %v949 = vpack.c.bf16 %v939, %v938
  %v950 = vpack.c.bf16 %v941, %v940
  %v951 = vpack.c.bf16 %v943, %v942
  %v952 = vld [vmem:[%s3] sm:$0xf]
  %v953 = vld [vmem:[%s3 + $0x4] sm:$0xf]
  %v954 = vld [vmem:[%s3 + $0x8] sm:$0xf]
  %v955 = vld [vmem:[%s3 + $0xc] sm:$0xf]
  %v956 = vld [vmem:[%s3 + $0x10] sm:$0xf]
  %v957 = vld [vmem:[%s3 + $0x14] sm:$0xf]
  %v958 = vld [vmem:[%s3 + $0x18] sm:$0xf]
  %v959 = vld [vmem:[%s3 + $0x1c] sm:$0xf]
  %v960 = vld [vmem:[%s3 + $0x20] sm:$0xf]
  %v961 = vld [vmem:[%s3 + $0x24] sm:$0xf]
  %v962 = vld [vmem:[%s3 + $0x28] sm:$0xf]
  %v963 = vld [vmem:[%s3 + $0x2c] sm:$0xf]
  %v964 = vlaneseq
  %v965 = vshrl.u32 %v964, 7
  %v966 = vsub.s32 3, %v965
  %v967 = vrot.slane %v72, %v966
  %v980 = vunpack.c.l.b16 %v952
  %v981 = vunpack.c.l.b16 %v953
  %v982 = vunpack.c.l.b16 %v954
  %v983 = vunpack.c.l.b16 %v955
  %v984 = vunpack.c.l.b16 %v956
  %v985 = vunpack.c.l.b16 %v957
  %v986 = vunpack.c.l.b16 %v958
  %v987 = vunpack.c.l.b16 %v959
  %v988 = vunpack.c.l.b16 %v960
  %v989 = vunpack.c.l.b16 %v961
  %v990 = vunpack.c.l.b16 %v962
  %v991 = vunpack.c.l.b16 %v963
  %v992 = vpack.c.b16 %v981, %v980
  %v993 = vpack.c.b16 %v983, %v982
  %v994 = vpack.c.b16 %v985, %v984
  %v995 = vpack.c.b16 %v987, %v986
  %v996 = vpack.c.b16 %v989, %v988
  %v997 = vpack.c.b16 %v991, %v990
  %vm1004 = vcmask 785408
  %v1006 = vsel %vm1004, %v944, 0
  %v1009 = vsel %vm1004, %v945, 0
  %v1012 = vsel %vm1004, %v946, 0
  %v1015 = vsel %vm1004, %v947, 0
  %v1018 = vsel %vm1004, %v948, 0
  %v1021 = vsel %vm1004, %v949, 0
  %v1024 = vsel %vm1004, %v950, 0
  %v1027 = vsel %vm1004, %v951, 0
  %1029 = vmatprep.subr.bf16.mxu0 0
  %1030 = vmatpush1.bf16.msra.mxu0 0
  %1031 = vmatprep.subr.bf16.mxu0 0
  %1032 = vmatpush1.bf16.msra.mxu0 0
  %1033 = vmatprep.subr.bf16.mxu0 0
  %1034 = vmatpush1.bf16.msra.mxu0 %v997
  %1035 = vmatprep.subr.bf16.mxu0 0
  %1036 = vmatpush1.bf16.msra.mxu0 %v996
  %1037 = vmatprep.subr.bf16.mxu0 0
  %1038 = vmatpush1.bf16.msra.mxu0 %v995
  %1039 = vmatprep.subr.bf16.mxu0 0
  %1040 = vmatpush1.bf16.msra.mxu0 %v994
  %1041 = vmatprep.subr.bf16.mxu0 0
  %1042 = vmatpush1.bf16.msra.mxu0 %v993
  %1043 = vmatprep.subr.bf16.mxu0 0
  %1044 = vmatpush1.bf16.msra.mxu0 %v992
  %1045 = vmatprep.subr.bf16.mxu0 0
  %1046 = vmatpush2.bf16.msra.mxu0 0
  %1047 = vmatprep.subr.bf16.mxu0 0
  %1048 = vmatpush2.bf16.msra.mxu0 0
  %1049 = vmatprep.subr.bf16.mxu0 0
  %1050 = vmatpush2.bf16.msra.mxu0 0
  %1051 = vmatprep.subr.bf16.mxu0 0
  %1052 = vmatpush2.bf16.msra.mxu0 0
  %1053 = vmatprep.subr.bf16.mxu0 0
  %1054 = vmatpush2.bf16.msra.mxu0 0
  %1055 = vmatprep.subr.bf16.mxu0 0
  %1056 = vmatpush2.bf16.msra.mxu0 0
  %1057 = vmatprep.subr.bf16.mxu0 0
  %1058 = vmatpush2.bf16.msra.mxu0 0
  %1059 = vmatprep.subr.bf16.mxu0 0
  %1060 = vmatpush2.bf16.msra.mxu0 0
  %1061 = vmatprep.mubr.bf16.mxu0 0
  %1062 = vmatmul.mubr.bf16.gmra.mxu0 %v1006
  %v1063 = vpop.f32.mrf.mxu0
  %v1064 = vadd.f32 %v967, %v1063
  %v1065 = vpop.f32.mrf.mxu0
  %v1066 = vpop.f32.mrf.mxu0
  %v1067 = vadd.f32 %v967, %v1066
  %v1068 = vpop.f32.mrf.mxu0
  %1069 = vmatprep.mubr.bf16.mxu0 0
  %1070 = vmatmul.mubr.bf16.gmra.mxu0 %v1009
  %v1071 = vpop.f32.mrf.mxu0
  %v1072 = vadd.f32 %v967, %v1071
  %v1073 = vpop.f32.mrf.mxu0
  %v1074 = vpop.f32.mrf.mxu0
  %v1075 = vadd.f32 %v967, %v1074
  %v1076 = vpop.f32.mrf.mxu0
  %1077 = vmatprep.mubr.bf16.mxu0 0
  %1078 = vmatmul.mubr.bf16.gmra.mxu0 %v1012
  %v1079 = vpop.f32.mrf.mxu0
  %v1080 = vadd.f32 %v967, %v1079
  %v1081 = vpop.f32.mrf.mxu0
  %v1082 = vpop.f32.mrf.mxu0
  %v1083 = vadd.f32 %v967, %v1082
  %v1084 = vpop.f32.mrf.mxu0
  %1085 = vmatprep.mubr.bf16.mxu0 0
  %1086 = vmatmul.mubr.bf16.gmra.mxu0 %v1015
  %v1087 = vpop.f32.mrf.mxu0
  %v1088 = vadd.f32 %v967, %v1087
  %v1089 = vpop.f32.mrf.mxu0
  %v1090 = vpop.f32.mrf.mxu0
  %v1091 = vadd.f32 %v967, %v1090
  %v1092 = vpop.f32.mrf.mxu0
  %1093 = vmatprep.mubr.bf16.mxu0 0
  %1094 = vmatmul.mubr.bf16.gmra.mxu0 %v1018
  %v1095 = vpop.f32.mrf.mxu0
  %v1096 = vadd.f32 %v967, %v1095
  %v1097 = vpop.f32.mrf.mxu0
  %v1098 = vpop.f32.mrf.mxu0
  %v1099 = vadd.f32 %v967, %v1098
  %v1100 = vpop.f32.mrf.mxu0
  %1101 = vmatprep.mubr.bf16.mxu0 0
  %1102 = vmatmul.mubr.bf16.gmra.mxu0 %v1021
  %v1103 = vpop.f32.mrf.mxu0
  %v1104 = vadd.f32 %v967, %v1103
  %v1105 = vpop.f32.mrf.mxu0
  %v1106 = vpop.f32.mrf.mxu0
  %v1107 = vadd.f32 %v967, %v1106
  %v1108 = vpop.f32.mrf.mxu0
  %1109 = vmatprep.mubr.bf16.mxu0 0
  %1110 = vmatmul.mubr.bf16.gmra.mxu0 %v1024
  %v1111 = vpop.f32.mrf.mxu0
  %v1112 = vadd.f32 %v967, %v1111
  %v1113 = vpop.f32.mrf.mxu0
  %v1114 = vpop.f32.mrf.mxu0
  %v1115 = vadd.f32 %v967, %v1114
  %v1116 = vpop.f32.mrf.mxu0
  %1117 = vmatprep.mubr.bf16.mxu0 0
  %1118 = vmatmul.mubr.bf16.gmra.mxu0 %v1027
  %v1119 = vpop.f32.mrf.mxu0
  %v1120 = vadd.f32 %v967, %v1119
  %v1121 = vpop.f32.mrf.mxu0
  %v1122 = vpop.f32.mrf.mxu0
  %v1123 = vadd.f32 %v967, %v1122
  %v1124 = vpop.f32.mrf.mxu0
  %1125 = vdwg.mxu0
  %v1126 = vmax.f32 %v1064, 0.0
  %v1127 = vmax.f32 %v1067, 0.0
  %v1128 = vmax.f32 %v1072, 0.0
  %v1129 = vmax.f32 %v1075, 0.0
  %v1130 = vmax.f32 %v1080, 0.0
  %v1131 = vmax.f32 %v1083, 0.0
  %v1132 = vmax.f32 %v1088, 0.0
  %v1133 = vmax.f32 %v1091, 0.0
  %v1134 = vmax.f32 %v1096, 0.0
  %v1135 = vmax.f32 %v1099, 0.0
  %v1136 = vmax.f32 %v1104, 0.0
  %v1137 = vmax.f32 %v1107, 0.0
  %v1138 = vmax.f32 %v1112, 0.0
  %v1139 = vmax.f32 %v1115, 0.0
  %v1140 = vmax.f32 %v1120, 0.0
  %v1141 = vmax.f32 %v1123, 0.0
  %v1142 = vlaneseq
  %v1143 = vshrl.u32 %v1142, 7
  %v1144 = vsub.s32 4, %v1143
  %v1145 = vrot.slane %v72, %v1144
  %v1146 = vmul.f32 %v1126, %v1145
  %v1147 = vmul.f32 %v1127, %v1145
  %v1148 = vmul.f32 %v1128, %v1145
  %v1149 = vmul.f32 %v1129, %v1145
  %v1150 = vmul.f32 %v1130, %v1145
  %v1151 = vmul.f32 %v1131, %v1145
  %v1152 = vmul.f32 %v1132, %v1145
  %v1153 = vmul.f32 %v1133, %v1145
  %v1154 = vmul.f32 %v1134, %v1145
  %v1155 = vmul.f32 %v1135, %v1145
  %v1156 = vmul.f32 %v1136, %v1145
  %v1157 = vmul.f32 %v1137, %v1145
  %v1158 = vmul.f32 %v1138, %v1145
  %v1159 = vmul.f32 %v1139, %v1145
  %v1160 = vmul.f32 %v1140, %v1145
  %v1161 = vmul.f32 %v1141, %v1145
  %v1162 = vlaneseq
  %v1163 = vshrl.u32 %v1162, 7
  %v1164 = vsub.s32 5, %v1163
  %v1165 = vrot.slane %v72, %v1164
  %v1166 = vadd.f32 %v1146, %v1165
  %v1167 = vadd.f32 %v1147, %v1165
  %v1168 = vadd.f32 %v1148, %v1165
  %v1169 = vadd.f32 %v1149, %v1165
  %v1170 = vadd.f32 %v1150, %v1165
  %v1171 = vadd.f32 %v1151, %v1165
  %v1172 = vadd.f32 %v1152, %v1165
  %v1173 = vadd.f32 %v1153, %v1165
  %v1174 = vadd.f32 %v1154, %v1165
  %v1175 = vadd.f32 %v1155, %v1165
  %v1176 = vadd.f32 %v1156, %v1165
  %v1177 = vadd.f32 %v1157, %v1165
  %v1178 = vadd.f32 %v1158, %v1165
  %v1179 = vadd.f32 %v1159, %v1165
  %v1180 = vadd.f32 %v1160, %v1165
  %v1181 = vadd.f32 %v1161, %v1165
  %v1182 = vrot.slane %v1166, 7
  %v1183 = vrot.slane %v1167, 7
  %v1184 = vrot.slane %v1168, 7
  %v1185 = vrot.slane %v1169, 7
  %v1186 = vrot.slane %v1170, 7
  %v1187 = vrot.slane %v1171, 7
  %v1188 = vrot.slane %v1172, 7
  %v1189 = vrot.slane %v1173, 7
  %v1190 = vrot.slane %v1174, 7
  %v1191 = vrot.slane %v1175, 7
  %v1192 = vrot.slane %v1176, 7
  %v1193 = vrot.slane %v1177, 7
  %v1194 = vrot.slane %v1178, 7
  %v1195 = vrot.slane %v1179, 7
  %v1196 = vrot.slane %v1180, 7
  %v1197 = vrot.slane %v1181, 7
  %v1198 = vsel %vm92, %v1196, %v1197
  %v1199 = vsel %vm92, %v1195, %v1196
  %v1200 = vsel %vm92, %v1194, %v1195
  %v1201 = vsel %vm92, %v1193, %v1194
  %v1202 = vsel %vm92, %v1192, %v1193
  %v1203 = vsel %vm92, %v1191, %v1192
  %v1204 = vsel %vm92, %v1190, %v1191
  %v1205 = vsel %vm92, %v1189, %v1190
  %v1206 = vsel %vm92, %v1188, %v1189
  %v1207 = vsel %vm92, %v1187, %v1188
  %v1208 = vsel %vm92, %v1186, %v1187
  %v1209 = vsel %vm92, %v1185, %v1186
  %v1210 = vsel %vm92, %v1184, %v1185
  %v1211 = vsel %vm92, %v1183, %v1184
  %v1212 = vsel %vm92, %v1182, %v1183
  %v1213 = vsel %vm92, %v1197, %v1182
  %v1214 = vmul.f32 %v1213, %v112
  %v1215 = vmul.f32 %v1212, %v117
  %v1216 = vmul.f32 %v1211, %v122
  %v1217 = vmul.f32 %v1210, %v127
  %v1218 = vmul.f32 %v1209, %v132
  %v1219 = vmul.f32 %v1208, %v137
  %v1220 = vmul.f32 %v1207, %v142
  %v1221 = vmul.f32 %v1206, %v147
  %v1222 = vmul.f32 %v1205, %v152
  %v1223 = vmul.f32 %v1204, %v157
  %v1224 = vmul.f32 %v1203, %v162
  %v1225 = vmul.f32 %v1202, %v167
  %v1226 = vmul.f32 %v1201, %v172
  %v1227 = vmul.f32 %v1200, %v177
  %v1228 = vmul.f32 %v1199, %v182
  %v1229 = vmul.f32 %v1198, %v187
  %v1230 = vrot.slane %v1166, 1
  %v1231 = vrot.slane %v1167, 1
  %v1232 = vrot.slane %v1168, 1
  %v1233 = vrot.slane %v1169, 1
  %v1234 = vrot.slane %v1170, 1
  %v1235 = vrot.slane %v1171, 1
  %v1236 = vrot.slane %v1172, 1
  %v1237 = vrot.slane %v1173, 1
  %v1238 = vrot.slane %v1174, 1
  %v1239 = vrot.slane %v1175, 1
  %v1240 = vrot.slane %v1176, 1
  %v1241 = vrot.slane %v1177, 1
  %v1242 = vrot.slane %v1178, 1
  %v1243 = vrot.slane %v1179, 1
  %v1244 = vrot.slane %v1180, 1
  %v1245 = vrot.slane %v1181, 1
  %v1246 = vsel %vm221, %v1244, %v1245
  %v1247 = vsel %vm221, %v1243, %v1244
  %v1248 = vsel %vm221, %v1242, %v1243
  %v1249 = vsel %vm221, %v1241, %v1242
  %v1250 = vsel %vm221, %v1240, %v1241
  %v1251 = vsel %vm221, %v1239, %v1240
  %v1252 = vsel %vm221, %v1238, %v1239
  %v1253 = vsel %vm221, %v1237, %v1238
  %v1254 = vsel %vm221, %v1236, %v1237
  %v1255 = vsel %vm221, %v1235, %v1236
  %v1256 = vsel %vm221, %v1234, %v1235
  %v1257 = vsel %vm221, %v1233, %v1234
  %v1258 = vsel %vm221, %v1232, %v1233
  %v1259 = vsel %vm221, %v1231, %v1232
  %v1260 = vsel %vm221, %v1230, %v1231
  %v1261 = vsel %vm221, %v1245, %v1230
  %v1262 = vmul.f32 %v1260, %v240
  %v1263 = vmul.f32 %v1259, %v244
  %v1264 = vmul.f32 %v1258, %v248
  %v1265 = vmul.f32 %v1257, %v252
  %v1266 = vmul.f32 %v1256, %v256
  %v1267 = vmul.f32 %v1255, %v260
  %v1268 = vmul.f32 %v1254, %v264
  %v1269 = vmul.f32 %v1253, %v268
  %v1270 = vmul.f32 %v1252, %v272
  %v1271 = vmul.f32 %v1251, %v276
  %v1272 = vmul.f32 %v1250, %v280
  %v1273 = vmul.f32 %v1249, %v284
  %v1274 = vmul.f32 %v1248, %v288
  %v1275 = vmul.f32 %v1247, %v292
  %v1276 = vmul.f32 %v1246, %v296
  %v1277 = vmul.f32 %v1261, %v300
  %1294 = vrot.lane.b32.xlu0 %v1166, 16
  %v1295 = vpop.permute.xlu0 %1294
  %1296 = vrot.lane.b32.xlu0 %v1167, 16
  %v1297 = vpop.permute.xlu0 %1296
  %1298 = vrot.lane.b32.xlu0 %v1168, 16
  %v1299 = vpop.permute.xlu0 %1298
  %1300 = vrot.lane.b32.xlu0 %v1169, 16
  %v1301 = vpop.permute.xlu0 %1300
  %1302 = vrot.lane.b32.xlu0 %v1170, 16
  %v1303 = vpop.permute.xlu0 %1302
  %1304 = vrot.lane.b32.xlu0 %v1171, 16
  %v1305 = vpop.permute.xlu0 %1304
  %1306 = vrot.lane.b32.xlu0 %v1172, 16
  %v1307 = vpop.permute.xlu0 %1306
  %1308 = vrot.lane.b32.xlu0 %v1173, 16
  %v1309 = vpop.permute.xlu0 %1308
  %1310 = vrot.lane.b32.xlu0 %v1174, 16
  %v1311 = vpop.permute.xlu0 %1310
  %1312 = vrot.lane.b32.xlu0 %v1175, 16
  %v1313 = vpop.permute.xlu0 %1312
  %1314 = vrot.lane.b32.xlu0 %v1176, 16
  %v1315 = vpop.permute.xlu0 %1314
  %1316 = vrot.lane.b32.xlu0 %v1177, 16
  %v1317 = vpop.permute.xlu0 %1316
  %1318 = vrot.lane.b32.xlu0 %v1178, 16
  %v1319 = vpop.permute.xlu0 %1318
  %1320 = vrot.lane.b32.xlu0 %v1179, 16
  %v1321 = vpop.permute.xlu0 %1320
  %1322 = vrot.lane.b32.xlu0 %v1180, 16
  %v1323 = vpop.permute.xlu0 %1322
  %1324 = vrot.lane.b32.xlu0 %v1181, 16
  %v1325 = vpop.permute.xlu0 %1324
  %1358 = vrot.lane.b32.xlu0 %v1262, 32
  %v1359 = vpop.permute.xlu0 %1358
  %1360 = vrot.lane.b32.xlu0 %v1263, 32
  %v1361 = vpop.permute.xlu0 %1360
  %1362 = vrot.lane.b32.xlu0 %v1264, 32
  %v1363 = vpop.permute.xlu0 %1362
  %1364 = vrot.lane.b32.xlu0 %v1265, 32
  %v1365 = vpop.permute.xlu0 %1364
  %1366 = vrot.lane.b32.xlu0 %v1266, 32
  %v1367 = vpop.permute.xlu0 %1366
  %1368 = vrot.lane.b32.xlu0 %v1267, 32
  %v1369 = vpop.permute.xlu0 %1368
  %1370 = vrot.lane.b32.xlu0 %v1268, 32
  %v1371 = vpop.permute.xlu0 %1370
  %1372 = vrot.lane.b32.xlu0 %v1269, 32
  %v1373 = vpop.permute.xlu0 %1372
  %1374 = vrot.lane.b32.xlu0 %v1270, 32
  %v1375 = vpop.permute.xlu0 %1374
  %1376 = vrot.lane.b32.xlu0 %v1271, 32
  %v1377 = vpop.permute.xlu0 %1376
  %1378 = vrot.lane.b32.xlu0 %v1272, 32
  %v1379 = vpop.permute.xlu0 %1378
  %1380 = vrot.lane.b32.xlu0 %v1273, 32
  %v1381 = vpop.permute.xlu0 %1380
  %1382 = vrot.lane.b32.xlu0 %v1274, 32
  %v1383 = vpop.permute.xlu0 %1382
  %1384 = vrot.lane.b32.xlu0 %v1275, 32
  %v1385 = vpop.permute.xlu0 %1384
  %1386 = vrot.lane.b32.xlu0 %v1276, 32
  %v1387 = vpop.permute.xlu0 %1386
  %1388 = vrot.lane.b32.xlu0 %v1277, 32
  %v1389 = vpop.permute.xlu0 %1388
  %v1406 = vsel %vm463, %v1214, %v1295
  %v1407 = vsel %vm463, %v1215, %v1297
  %v1408 = vsel %vm463, %v1216, %v1299
  %v1409 = vsel %vm463, %v1217, %v1301
  %v1410 = vsel %vm463, %v1218, %v1303
  %v1411 = vsel %vm463, %v1219, %v1305
  %v1412 = vsel %vm463, %v1220, %v1307
  %v1413 = vsel %vm463, %v1221, %v1309
  %v1414 = vsel %vm463, %v1222, %v1311
  %v1415 = vsel %vm463, %v1223, %v1313
  %v1416 = vsel %vm463, %v1224, %v1315
  %v1417 = vsel %vm463, %v1225, %v1317
  %v1418 = vsel %vm463, %v1226, %v1319
  %v1419 = vsel %vm463, %v1227, %v1321
  %v1420 = vsel %vm463, %v1228, %v1323
  %v1421 = vsel %vm463, %v1229, %v1325
  %v1422 = vsel %vm910, %v1406, %v1359
  %v1423 = vsel %vm910, %v1407, %v1361
  %v1424 = vsel %vm910, %v1408, %v1363
  %v1425 = vsel %vm910, %v1409, %v1365
  %v1426 = vsel %vm910, %v1410, %v1367
  %v1427 = vsel %vm910, %v1411, %v1369
  %v1428 = vsel %vm910, %v1412, %v1371
  %v1429 = vsel %vm910, %v1413, %v1373
  %v1430 = vsel %vm910, %v1414, %v1375
  %v1431 = vsel %vm910, %v1415, %v1377
  %v1432 = vsel %vm910, %v1416, %v1379
  %v1433 = vsel %vm910, %v1417, %v1381
  %v1434 = vsel %vm910, %v1418, %v1383
  %v1435 = vsel %vm910, %v1419, %v1385
  %v1436 = vsel %vm910, %v1420, %v1387
  %v1437 = vsel %vm910, %v1421, %v1389
  %v1438 = vpack.c.bf16 %v1423, %v1422
  %v1439 = vpack.c.bf16 %v1425, %v1424
  %v1440 = vpack.c.bf16 %v1427, %v1426
  %v1441 = vpack.c.bf16 %v1429, %v1428
  %v1442 = vpack.c.bf16 %v1431, %v1430
  %v1443 = vpack.c.bf16 %v1433, %v1432
  %v1444 = vpack.c.bf16 %v1435, %v1434
  %v1445 = vpack.c.bf16 %v1437, %v1436
  %v1446 = vld [vmem:[%s4] sm:$0xf]
  %v1447 = vld [vmem:[%s4 + $0x4] sm:$0xf]
  %v1448 = vld [vmem:[%s4 + $0x8] sm:$0xf]
  %v1449 = vld [vmem:[%s4 + $0xc] sm:$0xf]
  %v1450 = vld [vmem:[%s4 + $0x10] sm:$0xf]
  %v1451 = vld [vmem:[%s4 + $0x14] sm:$0xf]
  %v1452 = vlaneseq
  %v1453 = vshrl.u32 %v1452, 7
  %v1454 = vsub.s32 6, %v1453
  %v1455 = vrot.slane %v72, %v1454
  %v1462 = vunpack.c.l.b16 %v1446
  %v1463 = vunpack.c.l.b16 %v1447
  %v1464 = vunpack.c.l.b16 %v1448
  %v1465 = vunpack.c.l.b16 %v1449
  %v1466 = vunpack.c.l.b16 %v1450
  %v1467 = vunpack.c.l.b16 %v1451
  %v1468 = vpack.c.b16 %v1463, %v1462
  %v1469 = vpack.c.b16 %v1465, %v1464
  %v1470 = vpack.c.b16 %v1467, %v1466
  %vm1474 = vcmask 392192
  %v1476 = vsel %vm1474, %v1438, 0
  %v1479 = vsel %vm1474, %v1439, 0
  %v1482 = vsel %vm1474, %v1440, 0
  %v1485 = vsel %vm1474, %v1441, 0
  %v1488 = vsel %vm1474, %v1442, 0
  %v1491 = vsel %vm1474, %v1443, 0
  %v1494 = vsel %vm1474, %v1444, 0
  %v1497 = vsel %vm1474, %v1445, 0
  %1499 = vmatprep.subr.bf16.mxu0 0
  %1500 = vmatpush1.bf16.msra.mxu0 0
  %1501 = vmatprep.subr.bf16.mxu0 0
  %1502 = vmatpush1.bf16.msra.mxu0 0
  %1503 = vmatprep.subr.bf16.mxu0 0
  %1504 = vmatpush1.bf16.msra.mxu0 0
  %1505 = vmatprep.subr.bf16.mxu0 0
  %1506 = vmatpush1.bf16.msra.mxu0 0
  %1507 = vmatprep.subr.bf16.mxu0 0
  %1508 = vmatpush1.bf16.msra.mxu0 0
  %1509 = vmatprep.subr.bf16.mxu0 0
  %1510 = vmatpush1.bf16.msra.mxu0 %v1470
  %1511 = vmatprep.subr.bf16.mxu0 0
  %1512 = vmatpush1.bf16.msra.mxu0 %v1469
  %1513 = vmatprep.subr.bf16.mxu0 0
  %1514 = vmatpush1.bf16.msra.mxu0 %v1468
  %1515 = vmatprep.subr.bf16.mxu0 0
  %1516 = vmatpush2.bf16.msra.mxu0 0
  %1517 = vmatprep.subr.bf16.mxu0 0
  %1518 = vmatpush2.bf16.msra.mxu0 0
  %1519 = vmatprep.subr.bf16.mxu0 0
  %1520 = vmatpush2.bf16.msra.mxu0 0
  %1521 = vmatprep.subr.bf16.mxu0 0
  %1522 = vmatpush2.bf16.msra.mxu0 0
  %1523 = vmatprep.subr.bf16.mxu0 0
  %1524 = vmatpush2.bf16.msra.mxu0 0
  %1525 = vmatprep.subr.bf16.mxu0 0
  %1526 = vmatpush2.bf16.msra.mxu0 0
  %1527 = vmatprep.subr.bf16.mxu0 0
  %1528 = vmatpush2.bf16.msra.mxu0 0
  %1529 = vmatprep.subr.bf16.mxu0 0
  %1530 = vmatpush2.bf16.msra.mxu0 0
  %1531 = vmatprep.mubr.bf16.mxu0 0
  %1532 = vmatmul.mubr.bf16.gmra.mxu0 %v1476
  %v1533 = vpop.f32.mrf.mxu0
  %v1534 = vadd.f32 %v1455, %v1533
  %v1535 = vpop.f32.mrf.mxu0
  %v1536 = vpop.f32.mrf.mxu0
  %v1537 = vadd.f32 %v1455, %v1536
  %v1538 = vpop.f32.mrf.mxu0
  %1539 = vmatprep.mubr.bf16.mxu0 0
  %1540 = vmatmul.mubr.bf16.gmra.mxu0 %v1479
  %v1541 = vpop.f32.mrf.mxu0
  %v1542 = vadd.f32 %v1455, %v1541
  %v1543 = vpop.f32.mrf.mxu0
  %v1544 = vpop.f32.mrf.mxu0
  %v1545 = vadd.f32 %v1455, %v1544
  %v1546 = vpop.f32.mrf.mxu0
  %1547 = vmatprep.mubr.bf16.mxu0 0
  %1548 = vmatmul.mubr.bf16.gmra.mxu0 %v1482
  %v1549 = vpop.f32.mrf.mxu0
  %v1550 = vadd.f32 %v1455, %v1549
  %v1551 = vpop.f32.mrf.mxu0
  %v1552 = vpop.f32.mrf.mxu0
  %v1553 = vadd.f32 %v1455, %v1552
  %v1554 = vpop.f32.mrf.mxu0
  %1555 = vmatprep.mubr.bf16.mxu0 0
  %1556 = vmatmul.mubr.bf16.gmra.mxu0 %v1485
  %v1557 = vpop.f32.mrf.mxu0
  %v1558 = vadd.f32 %v1455, %v1557
  %v1559 = vpop.f32.mrf.mxu0
  %v1560 = vpop.f32.mrf.mxu0
  %v1561 = vadd.f32 %v1455, %v1560
  %v1562 = vpop.f32.mrf.mxu0
  %1563 = vmatprep.mubr.bf16.mxu0 0
  %1564 = vmatmul.mubr.bf16.gmra.mxu0 %v1488
  %v1565 = vpop.f32.mrf.mxu0
  %v1566 = vadd.f32 %v1455, %v1565
  %v1567 = vpop.f32.mrf.mxu0
  %v1568 = vpop.f32.mrf.mxu0
  %v1569 = vadd.f32 %v1455, %v1568
  %v1570 = vpop.f32.mrf.mxu0
  %1571 = vmatprep.mubr.bf16.mxu0 0
  %1572 = vmatmul.mubr.bf16.gmra.mxu0 %v1491
  %v1573 = vpop.f32.mrf.mxu0
  %v1574 = vadd.f32 %v1455, %v1573
  %v1575 = vpop.f32.mrf.mxu0
  %v1576 = vpop.f32.mrf.mxu0
  %v1577 = vadd.f32 %v1455, %v1576
  %v1578 = vpop.f32.mrf.mxu0
  %1579 = vmatprep.mubr.bf16.mxu0 0
  %1580 = vmatmul.mubr.bf16.gmra.mxu0 %v1494
  %v1581 = vpop.f32.mrf.mxu0
  %v1582 = vadd.f32 %v1455, %v1581
  %v1583 = vpop.f32.mrf.mxu0
  %v1584 = vpop.f32.mrf.mxu0
  %v1585 = vadd.f32 %v1455, %v1584
  %v1586 = vpop.f32.mrf.mxu0
  %1587 = vmatprep.mubr.bf16.mxu0 0
  %1588 = vmatmul.mubr.bf16.gmra.mxu0 %v1497
  %v1589 = vpop.f32.mrf.mxu0
  %v1590 = vadd.f32 %v1455, %v1589
  %v1591 = vpop.f32.mrf.mxu0
  %v1592 = vpop.f32.mrf.mxu0
  %v1593 = vadd.f32 %v1455, %v1592
  %v1594 = vpop.f32.mrf.mxu0
  %1595 = vdwg.mxu0
  %v1596 = vmax.f32 %v1534, 0.0
  %v1597 = vmax.f32 %v1537, 0.0
  %v1598 = vmax.f32 %v1542, 0.0
  %v1599 = vmax.f32 %v1545, 0.0
  %v1600 = vmax.f32 %v1550, 0.0
  %v1601 = vmax.f32 %v1553, 0.0
  %v1602 = vmax.f32 %v1558, 0.0
  %v1603 = vmax.f32 %v1561, 0.0
  %v1604 = vmax.f32 %v1566, 0.0
  %v1605 = vmax.f32 %v1569, 0.0
  %v1606 = vmax.f32 %v1574, 0.0
  %v1607 = vmax.f32 %v1577, 0.0
  %v1608 = vmax.f32 %v1582, 0.0
  %v1609 = vmax.f32 %v1585, 0.0
  %v1610 = vmax.f32 %v1590, 0.0
  %v1611 = vmax.f32 %v1593, 0.0
  %v1612 = vlaneseq
  %v1613 = vshrl.u32 %v1612, 7
  %v1614 = vsub.s32 7, %v1613
  %v1615 = vrot.slane %v72, %v1614
  %v1616 = vmul.f32 %v1596, %v1615
  %v1617 = vmul.f32 %v1597, %v1615
  %v1618 = vmul.f32 %v1598, %v1615
  %v1619 = vmul.f32 %v1599, %v1615
  %v1620 = vmul.f32 %v1600, %v1615
  %v1621 = vmul.f32 %v1601, %v1615
  %v1622 = vmul.f32 %v1602, %v1615
  %v1623 = vmul.f32 %v1603, %v1615
  %v1624 = vmul.f32 %v1604, %v1615
  %v1625 = vmul.f32 %v1605, %v1615
  %v1626 = vmul.f32 %v1606, %v1615
  %v1627 = vmul.f32 %v1607, %v1615
  %v1628 = vmul.f32 %v1608, %v1615
  %v1629 = vmul.f32 %v1609, %v1615
  %v1630 = vmul.f32 %v1610, %v1615
  %v1631 = vmul.f32 %v1611, %v1615
  %v1632 = vlaneseq
  %v1633 = vshrl.u32 %v1632, 7
  %v1634 = vsub.s32 0, %v1633
  %v1635 = vrot.slane %v73, %v1634
  %v1636 = vadd.f32 %v1616, %v1635
  %v1637 = vadd.f32 %v1617, %v1635
  %v1638 = vadd.f32 %v1618, %v1635
  %v1639 = vadd.f32 %v1619, %v1635
  %v1640 = vadd.f32 %v1620, %v1635
  %v1641 = vadd.f32 %v1621, %v1635
  %v1642 = vadd.f32 %v1622, %v1635
  %v1643 = vadd.f32 %v1623, %v1635
  %v1644 = vadd.f32 %v1624, %v1635
  %v1645 = vadd.f32 %v1625, %v1635
  %v1646 = vadd.f32 %v1626, %v1635
  %v1647 = vadd.f32 %v1627, %v1635
  %v1648 = vadd.f32 %v1628, %v1635
  %v1649 = vadd.f32 %v1629, %v1635
  %v1650 = vadd.f32 %v1630, %v1635
  %v1651 = vadd.f32 %v1631, %v1635
  %v1652 = vsel %vm463, %v1636, 0.0
  %v1653 = vsel %vm463, %v1637, 0.0
  %v1654 = vadd.f32 %v1652, %v1653
  %v1655 = vrot.slane %v1654, 4
  %v1656 = vadd.f32 %v1654, %v1655
  %v1657 = vrot.slane %v1656, 2
  %v1658 = vadd.f32 %v1656, %v1657
  %v1659 = vrot.slane %v1658, 1
  %v1660 = vadd.f32 %v1658, %v1659
  %v1661 = vsel %vm463, %v1638, 0.0
  %v1662 = vsel %vm463, %v1639, 0.0
  %v1663 = vadd.f32 %v1661, %v1662
  %v1664 = vrot.slane %v1663, 4
  %v1665 = vadd.f32 %v1663, %v1664
  %v1666 = vrot.slane %v1665, 2
  %v1667 = vadd.f32 %v1665, %v1666
  %v1668 = vrot.slane %v1667, 1
  %v1669 = vadd.f32 %v1667, %v1668
  %v1670 = vsel %vm463, %v1640, 0.0
  %v1671 = vsel %vm463, %v1641, 0.0
  %v1672 = vadd.f32 %v1670, %v1671
  %v1673 = vrot.slane %v1672, 4
  %v1674 = vadd.f32 %v1672, %v1673
  %v1675 = vrot.slane %v1674, 2
  %v1676 = vadd.f32 %v1674, %v1675
  %v1677 = vrot.slane %v1676, 1
  %v1678 = vadd.f32 %v1676, %v1677
  %v1679 = vsel %vm463, %v1642, 0.0
  %v1680 = vsel %vm463, %v1643, 0.0
  %v1681 = vadd.f32 %v1679, %v1680
  %v1682 = vrot.slane %v1681, 4
  %v1683 = vadd.f32 %v1681, %v1682
  %v1684 = vrot.slane %v1683, 2
  %v1685 = vadd.f32 %v1683, %v1684
  %v1686 = vrot.slane %v1685, 1
  %v1687 = vadd.f32 %v1685, %v1686
  %v1688 = vsel %vm463, %v1644, 0.0
  %v1689 = vsel %vm463, %v1645, 0.0
  %v1690 = vadd.f32 %v1688, %v1689
  %v1691 = vrot.slane %v1690, 4
  %v1692 = vadd.f32 %v1690, %v1691
  %v1693 = vrot.slane %v1692, 2
  %v1694 = vadd.f32 %v1692, %v1693
  %v1695 = vrot.slane %v1694, 1
  %v1696 = vadd.f32 %v1694, %v1695
  %v1697 = vsel %vm463, %v1646, 0.0
  %v1698 = vsel %vm463, %v1647, 0.0
  %v1699 = vadd.f32 %v1697, %v1698
  %v1700 = vrot.slane %v1699, 4
  %v1701 = vadd.f32 %v1699, %v1700
  %v1702 = vrot.slane %v1701, 2
  %v1703 = vadd.f32 %v1701, %v1702
  %v1704 = vrot.slane %v1703, 1
  %v1705 = vadd.f32 %v1703, %v1704
  %v1706 = vsel %vm463, %v1648, 0.0
  %v1707 = vsel %vm463, %v1649, 0.0
  %v1708 = vadd.f32 %v1706, %v1707
  %v1709 = vrot.slane %v1708, 4
  %v1710 = vadd.f32 %v1708, %v1709
  %v1711 = vrot.slane %v1710, 2
  %v1712 = vadd.f32 %v1710, %v1711
  %v1713 = vrot.slane %v1712, 1
  %v1714 = vadd.f32 %v1712, %v1713
  %v1715 = vsel %vm463, %v1650, 0.0
  %v1716 = vsel %vm463, %v1651, 0.0
  %v1717 = vadd.f32 %v1715, %v1716
  %v1718 = vrot.slane %v1717, 4
  %v1719 = vadd.f32 %v1717, %v1718
  %v1720 = vrot.slane %v1719, 2
  %v1721 = vadd.f32 %v1719, %v1720
  %v1722 = vrot.slane %v1721, 1
  %v1723 = vadd.f32 %v1721, %v1722
  %v1724 = vrcp.pop 16.0
  %v1725 = vmul.f32 %v1660, %v1724
  %v1726 = vmul.f32 %v1669, %v1724
  %v1727 = vmul.f32 %v1678, %v1724
  %v1728 = vmul.f32 %v1687, %v1724
  %v1729 = vmul.f32 %v1696, %v1724
  %v1730 = vmul.f32 %v1705, %v1724
  %v1731 = vmul.f32 %v1714, %v1724
  %v1732 = vmul.f32 %v1723, %v1724
  %v1733 = vlaneseq
  %v1734 = vshrl.u32 %v1733, 7
  %v1735 = vsub.s32 1, %v1734
  %v1736 = vrot.slane %v73, %v1735
  %v1737 = vmul.f32 %v1725, %v1736
  %v1738 = vmul.f32 %v1726, %v1736
  %v1739 = vmul.f32 %v1727, %v1736
  %v1740 = vmul.f32 %v1728, %v1736
  %v1741 = vmul.f32 %v1729, %v1736
  %v1742 = vmul.f32 %v1730, %v1736
  %v1743 = vmul.f32 %v1731, %v1736
  %v1744 = vmul.f32 %v1732, %v1736
  %v1753 = vrot.slane %v1738, 7
  %vm1754 = vcmask 1041409
  %v1755 = vsel %vm1754, %v1753, %v1737
  %v1756 = vrot.slane %v1739, 6
  %vm1757 = vcmask 1042434
  %v1758 = vsel %vm1757, %v1756, %v1755
  %v1759 = vrot.slane %v1740, 5
  %vm1760 = vcmask 1043459
  %v1761 = vsel %vm1760, %v1759, %v1758
  %v1762 = vrot.slane %v1741, 4
  %vm1763 = vcmask 1044484
  %v1764 = vsel %vm1763, %v1762, %v1761
  %v1765 = vrot.slane %v1742, 3
  %vm1766 = vcmask 1045509
  %v1767 = vsel %vm1766, %v1765, %v1764
  %v1768 = vrot.slane %v1743, 2
  %vm1769 = vcmask 1046534
  %v1770 = vsel %vm1769, %v1768, %v1767
  %v1771 = vrot.slane %v1744, 1
  %vm1772 = vcmask 1047559
  %v1773 = vsel %vm1772, %v1771, %v1770
  %v1775 = vsel %vm463, %v1773, 0.0
  %1776 = vadd.xlane.f32.xlu0 %v1775
  %v1777 = vpop.xlane.xlu0 %1776
  %v1778 = vlaneseq
  %v1779 = vshrl.u32 %v1778, 7
  %v1780 = vsub.s32 2, %v1779
  %v1781 = vrot.slane %v73, %v1780
  %v1782 = vadd.f32 %v1777, %v1781
  %vm1783 = vcmask 7168
  %1784 = vst.msk [vmem:[%s6] sm:$0xff] %vm1783, %v1782
  // Predicated region
  $region26: #{cnn1d_forward.1} parent=0 // pred_check
    _
  $region27: #{cnn1d_forward.1} parent=0 // pred_check_branch
    %1786 = sbr.rel (0) target = $region29
  $region28: #{cnn1d_forward.1} parent=0 // pred_region
    _
  $region29: #{cnn1d_forward.1} parent=0 // pred_fallthru
    _
  // Predicated region
  $region30: #{cnn1d_forward.1} parent=0 // pred_check
    _
  $region31: #{cnn1d_forward.1} parent=0 // pred_check_branch
    %1788 = sbr.rel (0) target = $region33
  $region32: #{cnn1d_forward.1} parent=0 // pred_region
    _
  $region33: #{cnn1d_forward.1} parent=0 // pred_fallthru
    _

</llo_original>
